<compile_context>
chip_gen: v7x
topology: tpu7x:2x2x1
jax: 0.10.0
libtpu: 0.0.40
codegen_flags: <defaults>
</compile_context>

<pallas_src>
import functools
import math

import jax
import jax.numpy as jnp
from jax.experimental import pallas as pl
from jax.experimental.pallas import tpu as pltpu


def _round_up(x, m):
    return ((x + m - 1) // m) * m


def _pick_block_b(B, L, Dk, kv_itemsize):
    """Batch rows per grid step, derived from a VMEM budget.

    The double-buffered kv block dominates per-step VMEM; budget it at ~16 MiB
    so the kernel (plus its f32 temporaries) fits v7x's 64 MiB physical VMEM
    and stays comfortably inside v5e/v6e.  Cap at 512 rows (per-step overhead
    amortization saturates) and keep >= 2 grid steps when the batch allows it
    so v7x's second TensorCore gets work under dimension_semantics=("parallel",).
    """
    kv_pair_budget = 16 * 1024 * 1024
    per_row_pair = max(1, 2 * L * Dk * kv_itemsize)
    tb = kv_pair_budget // per_row_pair
    tb = max(8, min(512, (tb // 8) * 8))
    b_pad = _round_up(B, 8)
    tb = min(tb, b_pad)
    if tb >= b_pad and b_pad >= 16:
        tb = max(8, ((b_pad // 2) // 8) * 8)
    return int(tb)


def _product_attention_kernel(q_ref, kv_ref, wq_ref, bq_ref, wkt_ref,
                              out_ref, attn_ref, *, inv_sqrt_key_dim):
    # Block shapes (full-extent on every non-batch dim -> no padded HBM copies):
    #   q_ref   : (TB, Dq)     kv_ref  : (TB, L, Dk)
    #   wq_ref  : (Dq, A)      bq_ref  : (1, A)      wkt_ref : (A, Dk)
    #   out_ref : (TB, Dk)     attn_ref: (TB, L)
    kv = kv_ref[...].astype(jnp.float32)                            # (TB, L, Dk)

    # Query projection; fold 1/sqrt(key_dim) here (A elements, not L).
    queries = (jnp.dot(q_ref[...], wq_ref[...],
                       preferred_element_type=jnp.float32)
               + bq_ref[...]) * inv_sqrt_key_dim                    # (TB, A)

    # Key projection eliminated algebraically:
    #   scores[b, l] = <q_proj[b], kv[b, l] @ Wk + bk> / sqrt(Dk)
    #                = <kv[b, l], Wk^T (q_proj[b] / sqrt(Dk))> + const(b)
    # const(b) (the bk term) is uniform along L and cancels in the softmax,
    # so bk is dropped entirely; only r = q_scaled @ Wk^T is needed.
    r = jnp.dot(queries, wkt_ref[...],
                preferred_element_type=jnp.float32)                 # (TB, Dk)

    # Scaled dot-product scores against the raw kv (native layout, no transpose).
    scores = jnp.einsum('bqd,bkd->bqk', r[:, None, :], kv,
                        preferred_element_type=jnp.float32)[:, 0, :]  # (TB, L)

    # Softmax over the sequence axis.
    m = jnp.max(scores, axis=-1, keepdims=True)
    e = jnp.exp(scores - m)
    denom = jnp.sum(e, axis=-1, keepdims=True)
    # approx=False keeps full f32 accuracy (demo asserts at 1e-5 tolerance).
    attn = e * pl.reciprocal(denom, approx=False)                   # (TB, L)

    # Context = attention-weighted sum of the *raw* key_value (PyTorch bmm).
    out = jnp.einsum('bqk,bkd->bqd', attn[:, None, :], kv,
                     preferred_element_type=jnp.float32)[:, 0, :]   # (TB, Dk)

    out_ref[...] = out.astype(out_ref.dtype)
    attn_ref[...] = attn.astype(attn_ref.dtype)


def product_attention(query, key_value, wq, bq, wk, bk=None, *, block_b=None):
    """query: (B, Dq); key_value: (B, L, Dk); wq: (Dq, A); wk: (Dk, A).

    Returns (context (B, Dk) in key_value.dtype, attention weights (B, L) f32).
    `bk` is accepted for interface parity but unused: its score contribution is
    constant along L and cancels exactly in the softmax.
    """
    del bk
    B, Dq = query.shape
    _, L, Dk = key_value.shape
    A = wq.shape[1]
    out_dtype = key_value.dtype
    kv_itemsize = jnp.dtype(key_value.dtype).itemsize

    TB = _pick_block_b(B, L, Dk, kv_itemsize) if block_b is None else block_b
    B_p = _round_up(B, TB)

    # Pad only the batch axis, and only when needed.  L / Dk / Dq / A keep
    # their natural sizes via full-extent blocks -> no padded HBM
    # re-materialization of key_value (padded rows are zero: finite scores,
    # uniform softmax, zero context; sliced off below).
    if B_p != B:
        qp = jnp.zeros((B_p, Dq), query.dtype).at[:B].set(query)
        kvp = jnp.zeros((B_p, L, Dk), key_value.dtype).at[:B].set(key_value)
    else:
        qp, kvp = query, key_value

    bq2 = bq.reshape(1, A)
    wkt = wk.T  # (A, Dk): kernel computes r = q_proj_scaled @ Wk^T directly.

    kernel = functools.partial(
        _product_attention_kernel,
        inv_sqrt_key_dim=1.0 / math.sqrt(Dk),   # matches np.sqrt(self.key_dim)
    )

    # Per-step VMEM estimate (double-buffered blocks + f32 temporaries) for an
    # explicit scoped-VMEM limit; v5e's default scoped limit is only 16 MiB.
    kv_blk = TB * L * Dk * kv_itemsize
    io_blk = (TB * Dq * jnp.dtype(query.dtype).itemsize
              + TB * Dk * jnp.dtype(out_dtype).itemsize + TB * L * 4)
    w_blk = (Dq * A + A + A * Dk) * 4
    est = 2 * (kv_blk + io_blk + w_blk) + 3 * TB * L * Dk * 4
    vmem_limit = int(min(max(est, 32 * 1024 * 1024), 48 * 1024 * 1024))

    # TODO(synk): for very long sequences add a second 'arbitrary' grid axis
    # over L with an online-softmax accumulator to bound VMEM independent of L.
    # TODO(synk): optionally carry kv / weights in bf16 (f32 accumulation) on
    # v6e/v7x; gated off here because the demo asserts at 1e-5 tolerance.
    grid_spec = pltpu.PrefetchScalarGridSpec(
        num_scalar_prefetch=0,
        grid=(B_p // TB,),
        in_specs=[
            pl.BlockSpec((TB, Dq), lambda b: (b, 0)),          # query rows
            pl.BlockSpec((TB, L, Dk), lambda b: (b, 0, 0)),    # raw key_value
            pl.BlockSpec((Dq, A), lambda b: (0, 0)),           # W_q
            pl.BlockSpec((1, A), lambda b: (0, 0)),            # b_q
            pl.BlockSpec((A, Dk), lambda b: (0, 0)),           # W_k^T
        ],
        out_specs=[
            pl.BlockSpec((TB, Dk), lambda b: (b, 0)),          # context
            pl.BlockSpec((TB, L), lambda b: (b, 0)),           # attention weights
        ],
    )

    out_p, attn_p = pl.pallas_call(
        kernel,
        out_shape=(jax.ShapeDtypeStruct((B_p, Dk), out_dtype),
                   jax.ShapeDtypeStruct((B_p, L), jnp.float32)),
        grid_spec=grid_spec,
        compiler_params=pltpu.CompilerParams(
            dimension_semantics=("parallel",),
            vmem_limit_bytes=vmem_limit),
    )(qp, kvp, wq, bq2, wkt)

    if B_p != B:
        return out_p[:B], attn_p[:B]
    return out_p, attn_p


def reference(query, key_value, wq, bq, wk, bk):
    # Pure-JAX reference of the PyTorch forward (includes bk; it cancels).
    key_dim = key_value.shape[-1]
    queries = query @ wq + bq                                    # (B, A)
    keys = key_value @ wk + bk                                   # (B, L, A)
    scores = jnp.einsum('ba,bla->bl', queries, keys) / math.sqrt(key_dim)
    attn = jax.nn.softmax(scores, axis=1)                        # (B, L)
    out = jnp.einsum('bl,bld->bd', attn, key_value)              # (B, key_dim)
    return out, attn


if __name__ == "__main__":
    B, L = 2, 8
    query_dim, key_dim, attn_dim = 32, 32, 32

    key = jax.random.PRNGKey(0)
    k1, k2, k3, k4, k5, k6 = jax.random.split(key, 6)

    query = jax.random.normal(k1, (B, query_dim), dtype=jnp.float32)
    key_value = jax.random.normal(k2, (B, L, key_dim), dtype=jnp.float32)

    # Deterministic Linear params (stored as (in, out); PyTorch stores (out, in)).
    bound_q = 1.0 / math.sqrt(query_dim)
    bound_k = 1.0 / math.sqrt(key_dim)
    wq = jax.random.uniform(k3, (query_dim, attn_dim), jnp.float32, -bound_q, bound_q)
    bq = jax.random.uniform(k4, (1, attn_dim), jnp.float32, -bound_q, bound_q)
    wk = jax.random.uniform(k5, (key_dim, attn_dim), jnp.float32, -bound_k, bound_k)
    bk = jax.random.uniform(k6, (1, attn_dim), jnp.float32, -bound_k, bound_k)
    # TODO(synk): value_proj params exist in the PyTorch __init__ but are unused
    # in forward(); intentionally omitted.

    out, attn = product_attention(query, key_value, wq, bq, wk, bk)
    jax.block_until_ready((out, attn))

    ref_out, ref_attn = reference(query, key_value, wq, bq, wk, bk)
    assert jnp.allclose(out, ref_out, atol=1e-5, rtol=1e-5)
    assert jnp.allclose(attn, ref_attn, atol=1e-5, rtol=1e-5)

    print("KERNEL_OK")
</pallas_src>

<mosaic_0001>
module attributes {stable_mosaic.version = 11 : i64} {
  func.func @_product_attention_kernel(%arg0: i32, %arg1: memref<8x32xf32, #tpu.memory_space<vmem>>, %arg2: memref<8x8x32xf32, #tpu.memory_space<vmem>>, %arg3: memref<32x32xf32, #tpu.memory_space<vmem>>, %arg4: memref<1x32xf32, #tpu.memory_space<vmem>>, %arg5: memref<32x32xf32, #tpu.memory_space<vmem>>, %arg6: memref<8x32xf32, #tpu.memory_space<vmem>>, %arg7: memref<8x8xf32, #tpu.memory_space<vmem>>) attributes {dimension_semantics = [#tpu.dimension_semantics<parallel>], iteration_bounds = array<i64: 1>, scalar_prefetch = 0 : i64, scratch_operands = 0 : i64, tpu.core_type = #tpu.core_type<tc>, window_params = [{transform_indices = @transform_0, window_bounds = array<i64: 8, 32>}, {transform_indices = @transform_1, window_bounds = array<i64: 8, 8, 32>}, {pipeline_mode = #tpu.pipeline_mode<synchronous>, transform_indices = @transform_2, window_bounds = array<i64: 32, 32>}, {pipeline_mode = #tpu.pipeline_mode<synchronous>, transform_indices = @transform_3, window_bounds = array<i64: 1, 32>}, {pipeline_mode = #tpu.pipeline_mode<synchronous>, transform_indices = @transform_4, window_bounds = array<i64: 32, 32>}, {transform_indices = @transform_5, window_bounds = array<i64: 8, 32>}, {transform_indices = @transform_6, window_bounds = array<i64: 8, 8>}]} {
    %c0 = arith.constant 0 : index
    %c0_0 = arith.constant 0 : index
    %c0_1 = arith.constant 0 : index
    %0 = vector.load %arg2[%c0, %c0_0, %c0_1] : memref<8x8x32xf32, #tpu.memory_space<vmem>>, vector<8x8x32xf32>
    %c0_2 = arith.constant 0 : index
    %c0_3 = arith.constant 0 : index
    %1 = vector.load %arg1[%c0_2, %c0_3] : memref<8x32xf32, #tpu.memory_space<vmem>>, vector<8x32xf32>
    %c0_4 = arith.constant 0 : index
    %c0_5 = arith.constant 0 : index
    %2 = vector.load %arg3[%c0_4, %c0_5] : memref<32x32xf32, #tpu.memory_space<vmem>>, vector<32x32xf32>
    %cst = arith.constant dense<0.000000e+00> : vector<8x32xf32>
    %3 = tpu.matmul %1, %2, %cst {dimension_numbers = #tpu.dot_dimension_numbers<[1], [0], [0], [1], [0, 0, 1, 1], [], []>} : vector<8x32xf32>, vector<32x32xf32>, vector<8x32xf32> -> vector<8x32xf32>
    %c0_6 = arith.constant 0 : index
    %c0_7 = arith.constant 0 : index
    %4 = vector.load %arg4[%c0_6, %c0_7] : memref<1x32xf32, #tpu.memory_space<vmem>>, vector<1x32xf32>
    %5 = vector.broadcast %4 : vector<1x32xf32> to vector<8x32xf32>
    %6 = arith.addf %3, %5 : vector<8x32xf32>
    %cst_8 = arith.constant 0.176776692 : f32
    %7 = vector.broadcast %cst_8 : f32 to vector<8x32xf32>
    %8 = arith.mulf %6, %7 : vector<8x32xf32>
    %c0_9 = arith.constant 0 : index
    %c0_10 = arith.constant 0 : index
    %9 = vector.load %arg5[%c0_9, %c0_10] : memref<32x32xf32, #tpu.memory_space<vmem>>, vector<32x32xf32>
    %cst_11 = arith.constant dense<0.000000e+00> : vector<8x32xf32>
    %10 = tpu.matmul %8, %9, %cst_11 {dimension_numbers = #tpu.dot_dimension_numbers<[1], [0], [0], [1], [0, 0, 1, 1], [], []>} : vector<8x32xf32>, vector<32x32xf32>, vector<8x32xf32> -> vector<8x32xf32>
    %11 = vector.shape_cast %10 : vector<8x32xf32> to vector<8x1x32xf32>
    "tpu.trace_start"() <{level = 10 : i32, message = "bqd,bkd->bqk"}> : () -> ()
    %cst_12 = arith.constant dense<0.000000e+00> : vector<8x1x8xf32>
    %12 = tpu.matmul %11, %0, %cst_12 {dimension_numbers = #tpu.dot_dimension_numbers<[2], [2], [1], [1], [0, 0, 0, 1, 1, 1], [0], [0]>} : vector<8x1x32xf32>, vector<8x8x32xf32>, vector<8x1x8xf32> -> vector<8x1x8xf32>
    "tpu.trace_stop"() : () -> ()
    %13 = vector.shape_cast %12 : vector<8x1x8xf32> to vector<8x8xf32>
    %cst_13 = arith.constant dense<0xFF800000> : vector<8xf32>
    %14 = vector.multi_reduction <maximumf>, %13, %cst_13 [1] : vector<8x8xf32> to vector<8xf32>
    %15 = vector.shape_cast %14 : vector<8xf32> to vector<8x1xf32>
    %16 = vector.broadcast %15 : vector<8x1xf32> to vector<8x8xf32>
    %17 = arith.subf %13, %16 : vector<8x8xf32>
    %18 = math.exp %17 : vector<8x8xf32>
    %cst_14 = arith.constant dense<0.000000e+00> : vector<8xf32>
    %19 = vector.multi_reduction <add>, %18, %cst_14 [1] : vector<8x8xf32> to vector<8xf32>
    %20 = vector.shape_cast %19 : vector<8xf32> to vector<8x1xf32>
    %21 = tpu.reciprocal %20 : vector<8x1xf32> -> vector<8x1xf32>
    %22 = vector.broadcast %21 : vector<8x1xf32> to vector<8x8xf32>
    %23 = arith.mulf %18, %22 : vector<8x8xf32>
    %24 = vector.shape_cast %23 : vector<8x8xf32> to vector<8x1x8xf32>
    "tpu.trace_start"() <{level = 10 : i32, message = "bqk,bkd->bqd"}> : () -> ()
    %cst_15 = arith.constant dense<0.000000e+00> : vector<8x1x32xf32>
    %25 = tpu.matmul %24, %0, %cst_15 {dimension_numbers = #tpu.dot_dimension_numbers<[2], [1], [1], [2], [0, 0, 0, 1, 1, 2], [0], [0]>} : vector<8x1x8xf32>, vector<8x8x32xf32>, vector<8x1x32xf32> -> vector<8x1x32xf32>
    "tpu.trace_stop"() : () -> ()
    %26 = vector.shape_cast %25 : vector<8x1x32xf32> to vector<8x32xf32>
    %c0_16 = arith.constant 0 : index
    %c0_17 = arith.constant 0 : index
    %27 = vector.load %arg6[%c0_16, %c0_17] : memref<8x32xf32, #tpu.memory_space<vmem>>, vector<8x32xf32>
    tpu.vector_store %arg6[%c0_16, %c0_17], %26 {strides = array<i32>} : memref<8x32xf32, #tpu.memory_space<vmem>>, vector<8x32xf32>,
    %c0_18 = arith.constant 0 : index
    %c0_19 = arith.constant 0 : index
    %28 = vector.load %arg7[%c0_18, %c0_19] : memref<8x8xf32, #tpu.memory_space<vmem>>, vector<8x8xf32>
    tpu.vector_store %arg7[%c0_18, %c0_19], %23 {strides = array<i32>} : memref<8x8xf32, #tpu.memory_space<vmem>>, vector<8x8xf32>,
    return
  }
  func.func @transform_0(%arg0: i32) -> (i32, i32) {
    %c0_i32 = arith.constant 0 : i32
    %c0_i32_0 = arith.constant 0 : i32
    return %arg0, %c0_i32 : i32, i32
  }
  func.func @transform_1(%arg0: i32) -> (i32, i32, i32) {
    %c0_i32 = arith.constant 0 : i32
    %c0_i32_0 = arith.constant 0 : i32
    %c0_i32_1 = arith.constant 0 : i32
    return %arg0, %c0_i32, %c0_i32_0 : i32, i32, i32
  }
  func.func @transform_2(%arg0: i32) -> (i32, i32) {
    %c0_i32 = arith.constant 0 : i32
    %c0_i32_0 = arith.constant 0 : i32
    %c0_i32_1 = arith.constant 0 : i32
    return %c0_i32, %c0_i32_0 : i32, i32
  }
  func.func @transform_3(%arg0: i32) -> (i32, i32) {
    %c0_i32 = arith.constant 0 : i32
    %c0_i32_0 = arith.constant 0 : i32
    %c0_i32_1 = arith.constant 0 : i32
    return %c0_i32, %c0_i32_0 : i32, i32
  }
  func.func @transform_4(%arg0: i32) -> (i32, i32) {
    %c0_i32 = arith.constant 0 : i32
    %c0_i32_0 = arith.constant 0 : i32
    %c0_i32_1 = arith.constant 0 : i32
    return %c0_i32, %c0_i32_0 : i32, i32
  }
  func.func @transform_5(%arg0: i32) -> (i32, i32) {
    %c0_i32 = arith.constant 0 : i32
    %c0_i32_0 = arith.constant 0 : i32
    return %arg0, %c0_i32 : i32, i32
  }
  func.func @transform_6(%arg0: i32) -> (i32, i32) {
    %c0_i32 = arith.constant 0 : i32
    %c0_i32_0 = arith.constant 0 : i32
    return %arg0, %c0_i32 : i32, i32
  }
}

</mosaic_0001>

<llo_original>
// kernel: tpu_custom_call.1
$region0: #{tpu_custom_call.1}
  #allocation0 [shape = 'u32[]', space=smem, size = 0x4, offset = 0x4, fixed_abs, tag = 'smem constant byte address 0x4 - core index']
  #allocation1 [shape = 'u32[144,128]{1,0:T(1,128)}', space=vmem, size = 0x12000, scoped, tag = 'internal scratch']
  %s0 = inlined_call_operand.hbm [shape: f32[8,32], index: 0, kind: input, shape index: {}]
  %s1 = inlined_call_operand.hbm [shape: f32[8,8,32], index: 1, kind: input, shape index: {}]
  %s2 = inlined_call_operand.hbm [shape: f32[32,32], index: 2, kind: input, shape index: {}]
  %s3 = inlined_call_operand.vmem [shape: f32[1,32], index: 3, kind: input, shape index: {}]
  %s4 = inlined_call_operand.hbm [shape: f32[32,32], index: 4, kind: input, shape index: {}]
  %s5 = inlined_call_operand.hbm [shape: f32[8,32], index: 5, kind: output, shape index: {0}]
  %s6 = inlined_call_operand.hbm [shape: f32[8,8], index: 6, kind: output, shape index: {1}]
  %7 = xla_tuple %s5, %s6
  %s8 = sld [smem:[#allocation0]]
  $region54: #{tpu_custom_call.1} parent=0
    _
  %s10 = ssub.s32 1, %s8
  %s11 = scalar_select 0, %s10, %s8
  $region1: #{tpu_custom_call.1} parent=0
    #allocation2 [shape = 'u8[4096]{0}', space=vmem, size = 0x1000, scoped, tag = 'input window, operand 0, single buffered']
    #allocation3 [shape = 's32[1]{0}', space=sflag, size = 0x4, scoped, tag = 'scoped memory for tpu_custom_call.1']
    #allocation4 [shape = 's32[1]{0}', space=sflag, size = 0x4, scoped, tag = 'scoped memory for tpu_custom_call.1']
    #allocation5 [shape = 'u8[32768]{0}', space=vmem, size = 0x8000, scoped, tag = 'input window, operand 1, single buffered']
    #allocation6 [shape = 's32[1]{0}', space=sflag, size = 0x4, scoped, tag = 'scoped memory for tpu_custom_call.1']
    #allocation7 [shape = 'u8[16384]{0}', space=vmem, size = 0x4000, scoped, tag = 'input window, operand 2, single buffered']
    #allocation8 [shape = 'u8[16384]{0}', space=vmem, size = 0x4000, scoped, tag = 'input window, operand 4, single buffered']
    #allocation9 [shape = 's32[1]{0}', space=sflag, size = 0x4, scoped, tag = 'scoped memory for tpu_custom_call.1']
    #allocation10 [shape = 'u8[4096]{0}', space=vmem, size = 0x1000, scoped, tag = 'output window, operand 0, single buffered']
    #allocation11 [shape = 'u8[4096]{0}', space=vmem, size = 0x1000, scoped, tag = 'output window, operand 1, single buffered']
    #allocation12 [shape = 's32[1]{0}', space=sflag, size = 0x4, scoped, tag = 'scoped memory for tpu_custom_call.1']
    %12 = vsyncpa [#allocation3], 0
    %13 = vsyncpa [#allocation6], 0
    %14 = vsyncpa [#allocation9], 0
    %15 = vsyncpa [#allocation4], 0
    %16 = vsyncpa [#allocation12], 0
    // Predicated region
    $region2: #{tpu_custom_call.1} parent=1 // pred_check
      _
    $region3: #{tpu_custom_call.1} parent=1 // pred_check_branch
      %18 = sbr.rel (0) target = $region5
    $region4: #{tpu_custom_call.1} parent=1 // pred_region
      %s20 = ssub.s32 128, 128
      %21 = vsyncadd [#allocation3], %s20
      %s23 = sshll.u32 [#allocation2], 4
      %s24 = int_to_ptr.vmem [resolvable:$true] %s23
      %26 = dma.hbm_to_vmem [thread:$0]  %s0, 128, %s24, [#allocation3]
    $region5: #{tpu_custom_call.1} parent=1 // pred_fallthru
      _
    // Predicated region
    $region6: #{tpu_custom_call.1} parent=1 // pred_check
      _
    $region7: #{tpu_custom_call.1} parent=1 // pred_check_branch
      %28 = sbr.rel (0) target = $region9
    $region8: #{tpu_custom_call.1} parent=1 // pred_region
      %s30 = ssub.s32 1024, 1024
      %31 = vsyncadd [#allocation6], %s30
      %s32 = sshll.u32 [#allocation5], 4
      %s33 = int_to_ptr.vmem [resolvable:$true] %s32
      %38 = dma.hbm_to_vmem [thread:$0]  %s1, 1024, %s33, [#allocation6], 128, 128, 8
    $region9: #{tpu_custom_call.1} parent=1 // pred_fallthru
      _
    // Predicated region
    $region10: #{tpu_custom_call.1} parent=1 // pred_check
      _
    $region11: #{tpu_custom_call.1} parent=1 // pred_check_branch
      %40 = sbr.rel (0) target = $region13
    $region12: #{tpu_custom_call.1} parent=1 // pred_region
      %s42 = ssub.s32 512, 512
      %43 = vsyncadd [#allocation6], %s42
      %s44 = sshll.u32 [#allocation7], 4
      %s45 = int_to_ptr.vmem [resolvable:$true] %s44
      %50 = dma.hbm_to_vmem [thread:$0]  %s2, 512, %s45, [#allocation6], 128, 128, 8
    $region13: #{tpu_custom_call.1} parent=1 // pred_fallthru
      _
    // Predicated region
    $region14: #{tpu_custom_call.1} parent=1 // pred_check
      _
    $region15: #{tpu_custom_call.1} parent=1 // pred_check_branch
      %52 = sbr.rel (0) target = $region17
    $region16: #{tpu_custom_call.1} parent=1 // pred_region
      _
    $region17: #{tpu_custom_call.1} parent=1 // pred_fallthru
      _
    // Predicated region
    $region18: #{tpu_custom_call.1} parent=1 // pred_check
      _
    $region19: #{tpu_custom_call.1} parent=1 // pred_check_branch
      %54 = sbr.rel (0) target = $region21
    $region20: #{tpu_custom_call.1} parent=1 // pred_region
      %s56 = ssub.s32 512, 512
      %57 = vsyncadd [#allocation9], %s56
      %s58 = sshll.u32 [#allocation8], 4
      %s59 = int_to_ptr.vmem [resolvable:$true] %s58
      %64 = dma.hbm_to_vmem [thread:$0]  %s4, 512, %s59, [#allocation9], 128, 128, 8
    $region21: #{tpu_custom_call.1} parent=1 // pred_fallthru
      _
    // Predicated region
    $region22: #{tpu_custom_call.1} parent=1 // pred_check
      _
    $region23: #{tpu_custom_call.1} parent=1 // pred_check_branch
      %66 = sbr.rel (0) target = $region25
    $region24: #{tpu_custom_call.1} parent=1 // pred_region
      %67 = dma.done [#allocation3], 128
    $region25: #{tpu_custom_call.1} parent=1 // pred_fallthru
      _
    // Predicated region
    $region26: #{tpu_custom_call.1} parent=1 // pred_check
      _
    $region27: #{tpu_custom_call.1} parent=1 // pred_check_branch
      %69 = sbr.rel (0) target = $region29
    $region28: #{tpu_custom_call.1} parent=1 // pred_region
      %70 = dma.done [#allocation6], 1024
    $region29: #{tpu_custom_call.1} parent=1 // pred_fallthru
      _
    // Predicated region
    $region30: #{tpu_custom_call.1} parent=1 // pred_check
      _
    $region31: #{tpu_custom_call.1} parent=1 // pred_check_branch
      %72 = sbr.rel (0) target = $region33
    $region32: #{tpu_custom_call.1} parent=1 // pred_region
      %73 = dma.done [#allocation6], 512
    $region33: #{tpu_custom_call.1} parent=1 // pred_fallthru
      _
    // Predicated region
    $region34: #{tpu_custom_call.1} parent=1 // pred_check
      _
    $region35: #{tpu_custom_call.1} parent=1 // pred_check_branch
      %75 = sbr.rel (0) target = $region37
    $region36: #{tpu_custom_call.1} parent=1 // pred_region
      %76 = dma.done [#allocation9], 512
    $region37: #{tpu_custom_call.1} parent=1 // pred_fallthru
      _
    %v77 = vld [vmem:[#allocation5] sm:$0xff]
    %v78 = vld [vmem:[#allocation5 + $0x8] sm:$0xff]
    %v79 = vld [vmem:[#allocation5 + $0x10] sm:$0xff]
    %v80 = vld [vmem:[#allocation5 + $0x18] sm:$0xff]
    %v81 = vld [vmem:[#allocation5 + $0x20] sm:$0xff]
    %v82 = vld [vmem:[#allocation5 + $0x28] sm:$0xff]
    %v83 = vld [vmem:[#allocation5 + $0x30] sm:$0xff]
    %v84 = vld [vmem:[#allocation5 + $0x38] sm:$0xff]
    %v85 = vld [vmem:[#allocation2] sm:$0xff]
    %v86 = vld [vmem:[#allocation7] sm:$0xff]
    %v87 = vld [vmem:[#allocation7 + $0x8] sm:$0xff]
    %v88 = vld [vmem:[#allocation7 + $0x10] sm:$0xff]
    %v89 = vld [vmem:[#allocation7 + $0x18] sm:$0xff]
    %v90 = vld [vmem:[%s3] sm:$0x1]
    %v92 = vlaneseq
    %v93 = vshrl.u32 %v92, 7
    %v94 = vsub.s32 0, %v93
    %v95 = vrot.slane %v90, %v94
    %vm97 = vcmask 261120
    %v99 = vsel %vm97, %v85, 0
    %101 = vmatprep.subr.mxu0 0.0
    %102 = vmatpush1.msra.mxu0 %v86
    %103 = vmatprep.subr.mxu0 0.0
    %104 = vmatpush1.msra.mxu0 %v87
    %105 = vmatprep.subr.mxu0 0.0
    %106 = vmatpush1.msra.mxu0 %v88
    %107 = vmatprep.subr.mxu0 0.0
    %108 = vmatpush1.msra.mxu0 %v89
    %109 = vmatprep.subr.mxu0 0.0
    %110 = vmatpush1.msra.mxu0 0.0
    %111 = vmatprep.subr.mxu0 0.0
    %112 = vmatpush1.msra.mxu0 0.0
    %113 = vmatprep.subr.mxu0 0.0
    %114 = vmatpush1.msra.mxu0 0.0
    %115 = vmatprep.subr.mxu0 0.0
    %116 = vmatpush1.msra.mxu0 0.0
    %117 = vmatprep.subr.mxu0 0.0
    %118 = vmatpush1.msra.mxu0 0.0
    %119 = vmatprep.subr.mxu0 0.0
    %120 = vmatpush1.msra.mxu0 0.0
    %121 = vmatprep.subr.mxu0 0.0
    %122 = vmatpush1.msra.mxu0 0.0
    %123 = vmatprep.subr.mxu0 0.0
    %124 = vmatpush1.msra.mxu0 0.0
    %125 = vmatprep.subr.mxu0 0.0
    %126 = vmatpush1.msra.mxu0 0.0
    %127 = vmatprep.subr.mxu0 0.0
    %128 = vmatpush1.msra.mxu0 0.0
    %129 = vmatprep.subr.mxu0 0.0
    %130 = vmatpush1.msra.mxu0 0.0
    %131 = vmatprep.subr.mxu0 0.0
    %132 = vmatpush1.msra.mxu0 0.0
    %133 = vmatprep.subr.mxu0 0.0
    %134 = vmatpush1.msra.mxu0 0.0
    %135 = vmatprep.subr.mxu0 0.0
    %136 = vmatpush1.msra.mxu0 0.0
    %137 = vmatprep.subr.mxu0 0.0
    %138 = vmatpush1.msra.mxu0 0.0
    %139 = vmatprep.subr.mxu0 0.0
    %140 = vmatpush1.msra.mxu0 0.0
    %141 = vmatprep.subr.mxu0 0.0
    %142 = vmatpush1.msra.mxu0 0.0
    %143 = vmatprep.subr.mxu0 0.0
    %144 = vmatpush1.msra.mxu0 0.0
    %145 = vmatprep.subr.mxu0 0.0
    %146 = vmatpush1.msra.mxu0 0.0
    %147 = vmatprep.subr.mxu0 0.0
    %148 = vmatpush1.msra.mxu0 0.0
    %149 = vmatprep.subr.mxu0 0.0
    %150 = vmatpush1.msra.mxu0 0.0
    %151 = vmatprep.subr.mxu0 0.0
    %152 = vmatpush1.msra.mxu0 0.0
    %153 = vmatprep.subr.mxu0 0.0
    %154 = vmatpush1.msra.mxu0 0.0
    %155 = vmatprep.subr.mxu0 0.0
    %156 = vmatpush1.msra.mxu0 0.0
    %157 = vmatprep.subr.mxu0 0.0
    %158 = vmatpush1.msra.mxu0 0.0
    %159 = vmatprep.subr.mxu0 0.0
    %160 = vmatpush1.msra.mxu0 0.0
    %161 = vmatprep.subr.mxu0 0.0
    %162 = vmatpush1.msra.mxu0 0.0
    %163 = vmatprep.subr.mxu0 0.0
    %164 = vmatpush1.msra.mxu0 0.0
    %165 = vmatprep.mubr.f32.mxu0 0.0
    %166 = vmatmul.mubr.f32.gmra.mrb[0].mxu0 %v99
    %v167 = vpop.f32.mrb[0].mxu0
    %v168 = vadd.f32 %v95, %v167
    %v169 = vpop.f32.mrb[0].mxu0
    %170 = vdwg.mxu0
    %v171 = vmul.f32 %v168, 0.17677669
    %v172 = vld [vmem:[#allocation8] sm:$0xff]
    %v173 = vld [vmem:[#allocation8 + $0x8] sm:$0xff]
    %v174 = vld [vmem:[#allocation8 + $0x10] sm:$0xff]
    %v175 = vld [vmem:[#allocation8 + $0x18] sm:$0xff]
    %v177 = vsel %vm97, %v171, 0
    %179 = vmatprep.subr.mxu0 0.0
    %180 = vmatpush1.msra.mxu0 %v172
    %181 = vmatprep.subr.mxu0 0.0
    %182 = vmatpush1.msra.mxu0 %v173
    %183 = vmatprep.subr.mxu0 0.0
    %184 = vmatpush1.msra.mxu0 %v174
    %185 = vmatprep.subr.mxu0 0.0
    %186 = vmatpush1.msra.mxu0 %v175
    %187 = vmatprep.subr.mxu0 0.0
    %188 = vmatpush1.msra.mxu0 0.0
    %189 = vmatprep.subr.mxu0 0.0
    %190 = vmatpush1.msra.mxu0 0.0
    %191 = vmatprep.subr.mxu0 0.0
    %192 = vmatpush1.msra.mxu0 0.0
    %193 = vmatprep.subr.mxu0 0.0
    %194 = vmatpush1.msra.mxu0 0.0
    %195 = vmatprep.subr.mxu0 0.0
    %196 = vmatpush1.msra.mxu0 0.0
    %197 = vmatprep.subr.mxu0 0.0
    %198 = vmatpush1.msra.mxu0 0.0
    %199 = vmatprep.subr.mxu0 0.0
    %200 = vmatpush1.msra.mxu0 0.0
    %201 = vmatprep.subr.mxu0 0.0
    %202 = vmatpush1.msra.mxu0 0.0
    %203 = vmatprep.subr.mxu0 0.0
    %204 = vmatpush1.msra.mxu0 0.0
    %205 = vmatprep.subr.mxu0 0.0
    %206 = vmatpush1.msra.mxu0 0.0
    %207 = vmatprep.subr.mxu0 0.0
    %208 = vmatpush1.msra.mxu0 0.0
    %209 = vmatprep.subr.mxu0 0.0
    %210 = vmatpush1.msra.mxu0 0.0
    %211 = vmatprep.subr.mxu0 0.0
    %212 = vmatpush1.msra.mxu0 0.0
    %213 = vmatprep.subr.mxu0 0.0
    %214 = vmatpush1.msra.mxu0 0.0
    %215 = vmatprep.subr.mxu0 0.0
    %216 = vmatpush1.msra.mxu0 0.0
    %217 = vmatprep.subr.mxu0 0.0
    %218 = vmatpush1.msra.mxu0 0.0
    %219 = vmatprep.subr.mxu0 0.0
    %220 = vmatpush1.msra.mxu0 0.0
    %221 = vmatprep.subr.mxu0 0.0
    %222 = vmatpush1.msra.mxu0 0.0
    %223 = vmatprep.subr.mxu0 0.0
    %224 = vmatpush1.msra.mxu0 0.0
    %225 = vmatprep.subr.mxu0 0.0
    %226 = vmatpush1.msra.mxu0 0.0
    %227 = vmatprep.subr.mxu0 0.0
    %228 = vmatpush1.msra.mxu0 0.0
    %229 = vmatprep.subr.mxu0 0.0
    %230 = vmatpush1.msra.mxu0 0.0
    %231 = vmatprep.subr.mxu0 0.0
    %232 = vmatpush1.msra.mxu0 0.0
    %233 = vmatprep.subr.mxu0 0.0
    %234 = vmatpush1.msra.mxu0 0.0
    %235 = vmatprep.subr.mxu0 0.0
    %236 = vmatpush1.msra.mxu0 0.0
    %237 = vmatprep.subr.mxu0 0.0
    %238 = vmatpush1.msra.mxu0 0.0
    %239 = vmatprep.subr.mxu0 0.0
    %240 = vmatpush1.msra.mxu0 0.0
    %241 = vmatprep.subr.mxu0 0.0
    %242 = vmatpush1.msra.mxu0 0.0
    %243 = vmatprep.mubr.f32.mxu0 0.0
    %244 = vmatmul.mubr.f32.gmra.mrb[0].mxu0 %v177
    %v245 = vpop.f32.mrb[0].mxu0
    %v246 = vadd.f32 0.0, %v245
    %v247 = vpop.f32.mrb[0].mxu0
    %248 = vdwg.mxu0
    %v250 = vcombine.high %v246, %v246
    %v252 = vunpack.c.l.s4 1966171168
    %v253 = vunpack.c.0.s8 %v252
    %v254 = vlaneseq
    %v255 = vshrl.u32 %v254, 7
    %v256 = vsub.s32 %v253, %v255
    %v257 = vrot.slane %v246, %v256
    %v259 = vunpack.c.l.s4 1966171168
    %v260 = vunpack.c.0.s8 %v259
    %v261 = vlaneseq
    %v262 = vshrl.u32 %v261, 7
    %v263 = vsub.s32 %v260, %v262
    %v264 = vrot.slane %v250, %v263
    %v265 = vcombine.high %v257, %v257
    %v266 = vcombine.high %v264, %v264
    %v268 = vunpack.c.l.s4 1966171168
    %v269 = vunpack.c.0.s8 %v268
    %v270 = vlaneseq
    %v271 = vshrl.u32 %v270, 7
    %v272 = vsub.s32 %v269, %v271
    %v273 = vrot.slane %v257, %v272
    %v275 = vunpack.c.l.s4 1966171168
    %v276 = vunpack.c.0.s8 %v275
    %v277 = vlaneseq
    %v278 = vshrl.u32 %v277, 7
    %v279 = vsub.s32 %v276, %v278
    %v280 = vrot.slane %v264, %v279
    %v282 = vunpack.c.l.s4 1966171168
    %v283 = vunpack.c.0.s8 %v282
    %v284 = vlaneseq
    %v285 = vshrl.u32 %v284, 7
    %v286 = vsub.s32 %v283, %v285
    %v287 = vrot.slane %v265, %v286
    %v289 = vunpack.c.l.s4 1966171168
    %v290 = vunpack.c.0.s8 %v289
    %v291 = vlaneseq
    %v292 = vshrl.u32 %v291, 7
    %v293 = vsub.s32 %v290, %v292
    %v294 = vrot.slane %v266, %v293
    %v295 = vcombine.high %v273, %v273
    %v296 = vcombine.high %v280, %v280
    %v297 = vcombine.high %v287, %v287
    %v298 = vcombine.high %v294, %v294
    %v299 = vsel %vm97, %v273, 0
    %v302 = vsel %vm97, %v77, 0
    %304 = vmatprep.subr.mxu0 0.0
    %305 = vmatpush1.xpose.msra.mxu0 %v302
    %306 = vmatprep.subr.mxu0 0.0
    %307 = vmatpush1.xpose.msra.mxu0 0.0
    %308 = vmatprep.subr.mxu0 0.0
    %309 = vmatpush1.xpose.msra.mxu0 0.0
    %310 = vmatprep.subr.mxu0 0.0
    %311 = vmatpush1.xpose.msra.mxu0 0.0
    %312 = vmatprep.subr.mxu0 0.0
    %313 = vmatpush1.xpose.msra.mxu0 0.0
    %314 = vmatprep.subr.mxu0 0.0
    %315 = vmatpush1.xpose.msra.mxu0 0.0
    %316 = vmatprep.subr.mxu0 0.0
    %317 = vmatpush1.xpose.msra.mxu0 0.0
    %318 = vmatprep.subr.mxu0 0.0
    %319 = vmatpush1.xpose.msra.mxu0 0.0
    %320 = vmatprep.subr.mxu0 0.0
    %321 = vmatpush1.xpose.msra.mxu0 0.0
    %322 = vmatprep.subr.mxu0 0.0
    %323 = vmatpush1.xpose.msra.mxu0 0.0
    %324 = vmatprep.subr.mxu0 0.0
    %325 = vmatpush1.xpose.msra.mxu0 0.0
    %326 = vmatprep.subr.mxu0 0.0
    %327 = vmatpush1.xpose.msra.mxu0 0.0
    %328 = vmatprep.subr.mxu0 0.0
    %329 = vmatpush1.xpose.msra.mxu0 0.0
    %330 = vmatprep.subr.mxu0 0.0
    %331 = vmatpush1.xpose.msra.mxu0 0.0
    %332 = vmatprep.subr.mxu0 0.0
    %333 = vmatpush1.xpose.msra.mxu0 0.0
    %334 = vmatprep.subr.mxu0 0.0
    %335 = vmatpush1.xpose.msra.mxu0 0.0
    %336 = vmatprep.subr.mxu0 0.0
    %337 = vmatpush1.xpose.msra.mxu0 0.0
    %338 = vmatprep.subr.mxu0 0.0
    %339 = vmatpush1.xpose.msra.mxu0 0.0
    %340 = vmatprep.subr.mxu0 0.0
    %341 = vmatpush1.xpose.msra.mxu0 0.0
    %342 = vmatprep.subr.mxu0 0.0
    %343 = vmatpush1.xpose.msra.mxu0 0.0
    %344 = vmatprep.subr.mxu0 0.0
    %345 = vmatpush1.xpose.msra.mxu0 0.0
    %346 = vmatprep.subr.mxu0 0.0
    %347 = vmatpush1.xpose.msra.mxu0 0.0
    %348 = vmatprep.subr.mxu0 0.0
    %349 = vmatpush1.xpose.msra.mxu0 0.0
    %350 = vmatprep.subr.mxu0 0.0
    %351 = vmatpush1.xpose.msra.mxu0 0.0
    %352 = vmatprep.subr.mxu0 0.0
    %353 = vmatpush1.xpose.msra.mxu0 0.0
    %354 = vmatprep.subr.mxu0 0.0
    %355 = vmatpush1.xpose.msra.mxu0 0.0
    %356 = vmatprep.subr.mxu0 0.0
    %357 = vmatpush1.xpose.msra.mxu0 0.0
    %358 = vmatprep.subr.mxu0 0.0
    %359 = vmatpush1.xpose.msra.mxu0 0.0
    %360 = vmatprep.subr.mxu0 0.0
    %361 = vmatpush1.xpose.msra.mxu0 0.0
    %362 = vmatprep.subr.mxu0 0.0
    %363 = vmatpush1.xpose.msra.mxu0 0.0
    %364 = vmatprep.subr.mxu0 0.0
    %365 = vmatpush1.xpose.msra.mxu0 0.0
    %366 = vmatprep.subr.mxu0 0.0
    %367 = vmatpush1.xpose.msra.mxu0 0.0
    %368 = vmatprep.mubr.f32.mxu0 0.0
    %369 = vmatmul.mubr.f32.gmra.mrb[0].mxu0 %v299
    %v370 = vpop.f32.mrb[0].mxu0
    %v371 = vadd.f32 0.0, %v370
    %v372 = vpop.f32.mrb[0].mxu0
    %373 = vdwg.mxu0
    %v374 = vsel %vm97, %v287, 0
    %v377 = vsel %vm97, %v78, 0
    %379 = vmatprep.subr.mxu0 0.0
    %380 = vmatpush1.xpose.msra.mxu0 %v377
    %381 = vmatprep.subr.mxu0 0.0
    %382 = vmatpush1.xpose.msra.mxu0 0.0
    %383 = vmatprep.subr.mxu0 0.0
    %384 = vmatpush1.xpose.msra.mxu0 0.0
    %385 = vmatprep.subr.mxu0 0.0
    %386 = vmatpush1.xpose.msra.mxu0 0.0
    %387 = vmatprep.subr.mxu0 0.0
    %388 = vmatpush1.xpose.msra.mxu0 0.0
    %389 = vmatprep.subr.mxu0 0.0
    %390 = vmatpush1.xpose.msra.mxu0 0.0
    %391 = vmatprep.subr.mxu0 0.0
    %392 = vmatpush1.xpose.msra.mxu0 0.0
    %393 = vmatprep.subr.mxu0 0.0
    %394 = vmatpush1.xpose.msra.mxu0 0.0
    %395 = vmatprep.subr.mxu0 0.0
    %396 = vmatpush1.xpose.msra.mxu0 0.0
    %397 = vmatprep.subr.mxu0 0.0
    %398 = vmatpush1.xpose.msra.mxu0 0.0
    %399 = vmatprep.subr.mxu0 0.0
    %400 = vmatpush1.xpose.msra.mxu0 0.0
    %401 = vmatprep.subr.mxu0 0.0
    %402 = vmatpush1.xpose.msra.mxu0 0.0
    %403 = vmatprep.subr.mxu0 0.0
    %404 = vmatpush1.xpose.msra.mxu0 0.0
    %405 = vmatprep.subr.mxu0 0.0
    %406 = vmatpush1.xpose.msra.mxu0 0.0
    %407 = vmatprep.subr.mxu0 0.0
    %408 = vmatpush1.xpose.msra.mxu0 0.0
    %409 = vmatprep.subr.mxu0 0.0
    %410 = vmatpush1.xpose.msra.mxu0 0.0
    %411 = vmatprep.subr.mxu0 0.0
    %412 = vmatpush1.xpose.msra.mxu0 0.0
    %413 = vmatprep.subr.mxu0 0.0
    %414 = vmatpush1.xpose.msra.mxu0 0.0
    %415 = vmatprep.subr.mxu0 0.0
    %416 = vmatpush1.xpose.msra.mxu0 0.0
    %417 = vmatprep.subr.mxu0 0.0
    %418 = vmatpush1.xpose.msra.mxu0 0.0
    %419 = vmatprep.subr.mxu0 0.0
    %420 = vmatpush1.xpose.msra.mxu0 0.0
    %421 = vmatprep.subr.mxu0 0.0
    %422 = vmatpush1.xpose.msra.mxu0 0.0
    %423 = vmatprep.subr.mxu0 0.0
    %424 = vmatpush1.xpose.msra.mxu0 0.0
    %425 = vmatprep.subr.mxu0 0.0
    %426 = vmatpush1.xpose.msra.mxu0 0.0
    %427 = vmatprep.subr.mxu0 0.0
    %428 = vmatpush1.xpose.msra.mxu0 0.0
    %429 = vmatprep.subr.mxu0 0.0
    %430 = vmatpush1.xpose.msra.mxu0 0.0
    %431 = vmatprep.subr.mxu0 0.0
    %432 = vmatpush1.xpose.msra.mxu0 0.0
    %433 = vmatprep.subr.mxu0 0.0
    %434 = vmatpush1.xpose.msra.mxu0 0.0
    %435 = vmatprep.subr.mxu0 0.0
    %436 = vmatpush1.xpose.msra.mxu0 0.0
    %437 = vmatprep.subr.mxu0 0.0
    %438 = vmatpush1.xpose.msra.mxu0 0.0
    %439 = vmatprep.subr.mxu0 0.0
    %440 = vmatpush1.xpose.msra.mxu0 0.0
    %441 = vmatprep.subr.mxu0 0.0
    %442 = vmatpush1.xpose.msra.mxu0 0.0
    %443 = vmatprep.mubr.f32.mxu0 0.0
    %444 = vmatmul.mubr.f32.gmra.mrb[0].mxu0 %v374
    %v445 = vpop.f32.mrb[0].mxu0
    %v446 = vadd.f32 0.0, %v445
    %v447 = vpop.f32.mrb[0].mxu0
    %448 = vdwg.mxu0
    %v449 = vsel %vm97, %v295, 0
    %v452 = vsel %vm97, %v79, 0
    %454 = vmatprep.subr.mxu0 0.0
    %455 = vmatpush1.xpose.msra.mxu0 %v452
    %456 = vmatprep.subr.mxu0 0.0
    %457 = vmatpush1.xpose.msra.mxu0 0.0
    %458 = vmatprep.subr.mxu0 0.0
    %459 = vmatpush1.xpose.msra.mxu0 0.0
    %460 = vmatprep.subr.mxu0 0.0
    %461 = vmatpush1.xpose.msra.mxu0 0.0
    %462 = vmatprep.subr.mxu0 0.0
    %463 = vmatpush1.xpose.msra.mxu0 0.0
    %464 = vmatprep.subr.mxu0 0.0
    %465 = vmatpush1.xpose.msra.mxu0 0.0
    %466 = vmatprep.subr.mxu0 0.0
    %467 = vmatpush1.xpose.msra.mxu0 0.0
    %468 = vmatprep.subr.mxu0 0.0
    %469 = vmatpush1.xpose.msra.mxu0 0.0
    %470 = vmatprep.subr.mxu0 0.0
    %471 = vmatpush1.xpose.msra.mxu0 0.0
    %472 = vmatprep.subr.mxu0 0.0
    %473 = vmatpush1.xpose.msra.mxu0 0.0
    %474 = vmatprep.subr.mxu0 0.0
    %475 = vmatpush1.xpose.msra.mxu0 0.0
    %476 = vmatprep.subr.mxu0 0.0
    %477 = vmatpush1.xpose.msra.mxu0 0.0
    %478 = vmatprep.subr.mxu0 0.0
    %479 = vmatpush1.xpose.msra.mxu0 0.0
    %480 = vmatprep.subr.mxu0 0.0
    %481 = vmatpush1.xpose.msra.mxu0 0.0
    %482 = vmatprep.subr.mxu0 0.0
    %483 = vmatpush1.xpose.msra.mxu0 0.0
    %484 = vmatprep.subr.mxu0 0.0
    %485 = vmatpush1.xpose.msra.mxu0 0.0
    %486 = vmatprep.subr.mxu0 0.0
    %487 = vmatpush1.xpose.msra.mxu0 0.0
    %488 = vmatprep.subr.mxu0 0.0
    %489 = vmatpush1.xpose.msra.mxu0 0.0
    %490 = vmatprep.subr.mxu0 0.0
    %491 = vmatpush1.xpose.msra.mxu0 0.0
    %492 = vmatprep.subr.mxu0 0.0
    %493 = vmatpush1.xpose.msra.mxu0 0.0
    %494 = vmatprep.subr.mxu0 0.0
    %495 = vmatpush1.xpose.msra.mxu0 0.0
    %496 = vmatprep.subr.mxu0 0.0
    %497 = vmatpush1.xpose.msra.mxu0 0.0
    %498 = vmatprep.subr.mxu0 0.0
    %499 = vmatpush1.xpose.msra.mxu0 0.0
    %500 = vmatprep.subr.mxu0 0.0
    %501 = vmatpush1.xpose.msra.mxu0 0.0
    %502 = vmatprep.subr.mxu0 0.0
    %503 = vmatpush1.xpose.msra.mxu0 0.0
    %504 = vmatprep.subr.mxu0 0.0
    %505 = vmatpush1.xpose.msra.mxu0 0.0
    %506 = vmatprep.subr.mxu0 0.0
    %507 = vmatpush1.xpose.msra.mxu0 0.0
    %508 = vmatprep.subr.mxu0 0.0
    %509 = vmatpush1.xpose.msra.mxu0 0.0
    %510 = vmatprep.subr.mxu0 0.0
    %511 = vmatpush1.xpose.msra.mxu0 0.0
    %512 = vmatprep.subr.mxu0 0.0
    %513 = vmatpush1.xpose.msra.mxu0 0.0
    %514 = vmatprep.subr.mxu0 0.0
    %515 = vmatpush1.xpose.msra.mxu0 0.0
    %516 = vmatprep.subr.mxu0 0.0
    %517 = vmatpush1.xpose.msra.mxu0 0.0
    %518 = vmatprep.mubr.f32.mxu0 0.0
    %519 = vmatmul.mubr.f32.gmra.mrb[0].mxu0 %v449
    %v520 = vpop.f32.mrb[0].mxu0
    %v521 = vadd.f32 0.0, %v520
    %v522 = vpop.f32.mrb[0].mxu0
    %523 = vdwg.mxu0
    %v524 = vsel %vm97, %v297, 0
    %v527 = vsel %vm97, %v80, 0
    %529 = vmatprep.subr.mxu0 0.0
    %530 = vmatpush1.xpose.msra.mxu0 %v527
    %531 = vmatprep.subr.mxu0 0.0
    %532 = vmatpush1.xpose.msra.mxu0 0.0
    %533 = vmatprep.subr.mxu0 0.0
    %534 = vmatpush1.xpose.msra.mxu0 0.0
    %535 = vmatprep.subr.mxu0 0.0
    %536 = vmatpush1.xpose.msra.mxu0 0.0
    %537 = vmatprep.subr.mxu0 0.0
    %538 = vmatpush1.xpose.msra.mxu0 0.0
    %539 = vmatprep.subr.mxu0 0.0
    %540 = vmatpush1.xpose.msra.mxu0 0.0
    %541 = vmatprep.subr.mxu0 0.0
    %542 = vmatpush1.xpose.msra.mxu0 0.0
    %543 = vmatprep.subr.mxu0 0.0
    %544 = vmatpush1.xpose.msra.mxu0 0.0
    %545 = vmatprep.subr.mxu0 0.0
    %546 = vmatpush1.xpose.msra.mxu0 0.0
    %547 = vmatprep.subr.mxu0 0.0
    %548 = vmatpush1.xpose.msra.mxu0 0.0
    %549 = vmatprep.subr.mxu0 0.0
    %550 = vmatpush1.xpose.msra.mxu0 0.0
    %551 = vmatprep.subr.mxu0 0.0
    %552 = vmatpush1.xpose.msra.mxu0 0.0
    %553 = vmatprep.subr.mxu0 0.0
    %554 = vmatpush1.xpose.msra.mxu0 0.0
    %555 = vmatprep.subr.mxu0 0.0
    %556 = vmatpush1.xpose.msra.mxu0 0.0
    %557 = vmatprep.subr.mxu0 0.0
    %558 = vmatpush1.xpose.msra.mxu0 0.0
    %559 = vmatprep.subr.mxu0 0.0
    %560 = vmatpush1.xpose.msra.mxu0 0.0
    %561 = vmatprep.subr.mxu0 0.0
    %562 = vmatpush1.xpose.msra.mxu0 0.0
    %563 = vmatprep.subr.mxu0 0.0
    %564 = vmatpush1.xpose.msra.mxu0 0.0
    %565 = vmatprep.subr.mxu0 0.0
    %566 = vmatpush1.xpose.msra.mxu0 0.0
    %567 = vmatprep.subr.mxu0 0.0
    %568 = vmatpush1.xpose.msra.mxu0 0.0
    %569 = vmatprep.subr.mxu0 0.0
    %570 = vmatpush1.xpose.msra.mxu0 0.0
    %571 = vmatprep.subr.mxu0 0.0
    %572 = vmatpush1.xpose.msra.mxu0 0.0
    %573 = vmatprep.subr.mxu0 0.0
    %574 = vmatpush1.xpose.msra.mxu0 0.0
    %575 = vmatprep.subr.mxu0 0.0
    %576 = vmatpush1.xpose.msra.mxu0 0.0
    %577 = vmatprep.subr.mxu0 0.0
    %578 = vmatpush1.xpose.msra.mxu0 0.0
    %579 = vmatprep.subr.mxu0 0.0
    %580 = vmatpush1.xpose.msra.mxu0 0.0
    %581 = vmatprep.subr.mxu0 0.0
    %582 = vmatpush1.xpose.msra.mxu0 0.0
    %583 = vmatprep.subr.mxu0 0.0
    %584 = vmatpush1.xpose.msra.mxu0 0.0
    %585 = vmatprep.subr.mxu0 0.0
    %586 = vmatpush1.xpose.msra.mxu0 0.0
    %587 = vmatprep.subr.mxu0 0.0
    %588 = vmatpush1.xpose.msra.mxu0 0.0
    %589 = vmatprep.subr.mxu0 0.0
    %590 = vmatpush1.xpose.msra.mxu0 0.0
    %591 = vmatprep.subr.mxu0 0.0
    %592 = vmatpush1.xpose.msra.mxu0 0.0
    %593 = vmatprep.mubr.f32.mxu0 0.0
    %594 = vmatmul.mubr.f32.gmra.mrb[0].mxu0 %v524
    %v595 = vpop.f32.mrb[0].mxu0
    %v596 = vadd.f32 0.0, %v595
    %v597 = vpop.f32.mrb[0].mxu0
    %598 = vdwg.mxu0
    %v599 = vsel %vm97, %v280, 0
    %v602 = vsel %vm97, %v81, 0
    %604 = vmatprep.subr.mxu0 0.0
    %605 = vmatpush1.xpose.msra.mxu0 %v602
    %606 = vmatprep.subr.mxu0 0.0
    %607 = vmatpush1.xpose.msra.mxu0 0.0
    %608 = vmatprep.subr.mxu0 0.0
    %609 = vmatpush1.xpose.msra.mxu0 0.0
    %610 = vmatprep.subr.mxu0 0.0
    %611 = vmatpush1.xpose.msra.mxu0 0.0
    %612 = vmatprep.subr.mxu0 0.0
    %613 = vmatpush1.xpose.msra.mxu0 0.0
    %614 = vmatprep.subr.mxu0 0.0
    %615 = vmatpush1.xpose.msra.mxu0 0.0
    %616 = vmatprep.subr.mxu0 0.0
    %617 = vmatpush1.xpose.msra.mxu0 0.0
    %618 = vmatprep.subr.mxu0 0.0
    %619 = vmatpush1.xpose.msra.mxu0 0.0
    %620 = vmatprep.subr.mxu0 0.0
    %621 = vmatpush1.xpose.msra.mxu0 0.0
    %622 = vmatprep.subr.mxu0 0.0
    %623 = vmatpush1.xpose.msra.mxu0 0.0
    %624 = vmatprep.subr.mxu0 0.0
    %625 = vmatpush1.xpose.msra.mxu0 0.0
    %626 = vmatprep.subr.mxu0 0.0
    %627 = vmatpush1.xpose.msra.mxu0 0.0
    %628 = vmatprep.subr.mxu0 0.0
    %629 = vmatpush1.xpose.msra.mxu0 0.0
    %630 = vmatprep.subr.mxu0 0.0
    %631 = vmatpush1.xpose.msra.mxu0 0.0
    %632 = vmatprep.subr.mxu0 0.0
    %633 = vmatpush1.xpose.msra.mxu0 0.0
    %634 = vmatprep.subr.mxu0 0.0
    %635 = vmatpush1.xpose.msra.mxu0 0.0
    %636 = vmatprep.subr.mxu0 0.0
    %637 = vmatpush1.xpose.msra.mxu0 0.0
    %638 = vmatprep.subr.mxu0 0.0
    %639 = vmatpush1.xpose.msra.mxu0 0.0
    %640 = vmatprep.subr.mxu0 0.0
    %641 = vmatpush1.xpose.msra.mxu0 0.0
    %642 = vmatprep.subr.mxu0 0.0
    %643 = vmatpush1.xpose.msra.mxu0 0.0
    %644 = vmatprep.subr.mxu0 0.0
    %645 = vmatpush1.xpose.msra.mxu0 0.0
    %646 = vmatprep.subr.mxu0 0.0
    %647 = vmatpush1.xpose.msra.mxu0 0.0
    %648 = vmatprep.subr.mxu0 0.0
    %649 = vmatpush1.xpose.msra.mxu0 0.0
    %650 = vmatprep.subr.mxu0 0.0
    %651 = vmatpush1.xpose.msra.mxu0 0.0
    %652 = vmatprep.subr.mxu0 0.0
    %653 = vmatpush1.xpose.msra.mxu0 0.0
    %654 = vmatprep.subr.mxu0 0.0
    %655 = vmatpush1.xpose.msra.mxu0 0.0
    %656 = vmatprep.subr.mxu0 0.0
    %657 = vmatpush1.xpose.msra.mxu0 0.0
    %658 = vmatprep.subr.mxu0 0.0
    %659 = vmatpush1.xpose.msra.mxu0 0.0
    %660 = vmatprep.subr.mxu0 0.0
    %661 = vmatpush1.xpose.msra.mxu0 0.0
    %662 = vmatprep.subr.mxu0 0.0
    %663 = vmatpush1.xpose.msra.mxu0 0.0
    %664 = vmatprep.subr.mxu0 0.0
    %665 = vmatpush1.xpose.msra.mxu0 0.0
    %666 = vmatprep.subr.mxu0 0.0
    %667 = vmatpush1.xpose.msra.mxu0 0.0
    %668 = vmatprep.mubr.f32.mxu0 0.0
    %669 = vmatmul.mubr.f32.gmra.mrb[0].mxu0 %v599
    %v670 = vpop.f32.mrb[0].mxu0
    %v671 = vadd.f32 0.0, %v670
    %v672 = vpop.f32.mrb[0].mxu0
    %673 = vdwg.mxu0
    %v674 = vsel %vm97, %v294, 0
    %v677 = vsel %vm97, %v82, 0
    %679 = vmatprep.subr.mxu0 0.0
    %680 = vmatpush1.xpose.msra.mxu0 %v677
    %681 = vmatprep.subr.mxu0 0.0
    %682 = vmatpush1.xpose.msra.mxu0 0.0
    %683 = vmatprep.subr.mxu0 0.0
    %684 = vmatpush1.xpose.msra.mxu0 0.0
    %685 = vmatprep.subr.mxu0 0.0
    %686 = vmatpush1.xpose.msra.mxu0 0.0
    %687 = vmatprep.subr.mxu0 0.0
    %688 = vmatpush1.xpose.msra.mxu0 0.0
    %689 = vmatprep.subr.mxu0 0.0
    %690 = vmatpush1.xpose.msra.mxu0 0.0
    %691 = vmatprep.subr.mxu0 0.0
    %692 = vmatpush1.xpose.msra.mxu0 0.0
    %693 = vmatprep.subr.mxu0 0.0
    %694 = vmatpush1.xpose.msra.mxu0 0.0
    %695 = vmatprep.subr.mxu0 0.0
    %696 = vmatpush1.xpose.msra.mxu0 0.0
    %697 = vmatprep.subr.mxu0 0.0
    %698 = vmatpush1.xpose.msra.mxu0 0.0
    %699 = vmatprep.subr.mxu0 0.0
    %700 = vmatpush1.xpose.msra.mxu0 0.0
    %701 = vmatprep.subr.mxu0 0.0
    %702 = vmatpush1.xpose.msra.mxu0 0.0
    %703 = vmatprep.subr.mxu0 0.0
    %704 = vmatpush1.xpose.msra.mxu0 0.0
    %705 = vmatprep.subr.mxu0 0.0
    %706 = vmatpush1.xpose.msra.mxu0 0.0
    %707 = vmatprep.subr.mxu0 0.0
    %708 = vmatpush1.xpose.msra.mxu0 0.0
    %709 = vmatprep.subr.mxu0 0.0
    %710 = vmatpush1.xpose.msra.mxu0 0.0
    %711 = vmatprep.subr.mxu0 0.0
    %712 = vmatpush1.xpose.msra.mxu0 0.0
    %713 = vmatprep.subr.mxu0 0.0
    %714 = vmatpush1.xpose.msra.mxu0 0.0
    %715 = vmatprep.subr.mxu0 0.0
    %716 = vmatpush1.xpose.msra.mxu0 0.0
    %717 = vmatprep.subr.mxu0 0.0
    %718 = vmatpush1.xpose.msra.mxu0 0.0
    %719 = vmatprep.subr.mxu0 0.0
    %720 = vmatpush1.xpose.msra.mxu0 0.0
    %721 = vmatprep.subr.mxu0 0.0
    %722 = vmatpush1.xpose.msra.mxu0 0.0
    %723 = vmatprep.subr.mxu0 0.0
    %724 = vmatpush1.xpose.msra.mxu0 0.0
    %725 = vmatprep.subr.mxu0 0.0
    %726 = vmatpush1.xpose.msra.mxu0 0.0
    %727 = vmatprep.subr.mxu0 0.0
    %728 = vmatpush1.xpose.msra.mxu0 0.0
    %729 = vmatprep.subr.mxu0 0.0
    %730 = vmatpush1.xpose.msra.mxu0 0.0
    %731 = vmatprep.subr.mxu0 0.0
    %732 = vmatpush1.xpose.msra.mxu0 0.0
    %733 = vmatprep.subr.mxu0 0.0
    %734 = vmatpush1.xpose.msra.mxu0 0.0
    %735 = vmatprep.subr.mxu0 0.0
    %736 = vmatpush1.xpose.msra.mxu0 0.0
    %737 = vmatprep.subr.mxu0 0.0
    %738 = vmatpush1.xpose.msra.mxu0 0.0
    %739 = vmatprep.subr.mxu0 0.0
    %740 = vmatpush1.xpose.msra.mxu0 0.0
    %741 = vmatprep.subr.mxu0 0.0
    %742 = vmatpush1.xpose.msra.mxu0 0.0
    %743 = vmatprep.mubr.f32.mxu0 0.0
    %744 = vmatmul.mubr.f32.gmra.mrb[0].mxu0 %v674
    %v745 = vpop.f32.mrb[0].mxu0
    %v746 = vadd.f32 0.0, %v745
    %v747 = vpop.f32.mrb[0].mxu0
    %748 = vdwg.mxu0
    %v749 = vsel %vm97, %v296, 0
    %v752 = vsel %vm97, %v83, 0
    %754 = vmatprep.subr.mxu0 0.0
    %755 = vmatpush1.xpose.msra.mxu0 %v752
    %756 = vmatprep.subr.mxu0 0.0
    %757 = vmatpush1.xpose.msra.mxu0 0.0
    %758 = vmatprep.subr.mxu0 0.0
    %759 = vmatpush1.xpose.msra.mxu0 0.0
    %760 = vmatprep.subr.mxu0 0.0
    %761 = vmatpush1.xpose.msra.mxu0 0.0
    %762 = vmatprep.subr.mxu0 0.0
    %763 = vmatpush1.xpose.msra.mxu0 0.0
    %764 = vmatprep.subr.mxu0 0.0
    %765 = vmatpush1.xpose.msra.mxu0 0.0
    %766 = vmatprep.subr.mxu0 0.0
    %767 = vmatpush1.xpose.msra.mxu0 0.0
    %768 = vmatprep.subr.mxu0 0.0
    %769 = vmatpush1.xpose.msra.mxu0 0.0
    %770 = vmatprep.subr.mxu0 0.0
    %771 = vmatpush1.xpose.msra.mxu0 0.0
    %772 = vmatprep.subr.mxu0 0.0
    %773 = vmatpush1.xpose.msra.mxu0 0.0
    %774 = vmatprep.subr.mxu0 0.0
    %775 = vmatpush1.xpose.msra.mxu0 0.0
    %776 = vmatprep.subr.mxu0 0.0
    %777 = vmatpush1.xpose.msra.mxu0 0.0
    %778 = vmatprep.subr.mxu0 0.0
    %779 = vmatpush1.xpose.msra.mxu0 0.0
    %780 = vmatprep.subr.mxu0 0.0
    %781 = vmatpush1.xpose.msra.mxu0 0.0
    %782 = vmatprep.subr.mxu0 0.0
    %783 = vmatpush1.xpose.msra.mxu0 0.0
    %784 = vmatprep.subr.mxu0 0.0
    %785 = vmatpush1.xpose.msra.mxu0 0.0
    %786 = vmatprep.subr.mxu0 0.0
    %787 = vmatpush1.xpose.msra.mxu0 0.0
    %788 = vmatprep.subr.mxu0 0.0
    %789 = vmatpush1.xpose.msra.mxu0 0.0
    %790 = vmatprep.subr.mxu0 0.0
    %791 = vmatpush1.xpose.msra.mxu0 0.0
    %792 = vmatprep.subr.mxu0 0.0
    %793 = vmatpush1.xpose.msra.mxu0 0.0
    %794 = vmatprep.subr.mxu0 0.0
    %795 = vmatpush1.xpose.msra.mxu0 0.0
    %796 = vmatprep.subr.mxu0 0.0
    %797 = vmatpush1.xpose.msra.mxu0 0.0
    %798 = vmatprep.subr.mxu0 0.0
    %799 = vmatpush1.xpose.msra.mxu0 0.0
    %800 = vmatprep.subr.mxu0 0.0
    %801 = vmatpush1.xpose.msra.mxu0 0.0
    %802 = vmatprep.subr.mxu0 0.0
    %803 = vmatpush1.xpose.msra.mxu0 0.0
    %804 = vmatprep.subr.mxu0 0.0
    %805 = vmatpush1.xpose.msra.mxu0 0.0
    %806 = vmatprep.subr.mxu0 0.0
    %807 = vmatpush1.xpose.msra.mxu0 0.0
    %808 = vmatprep.subr.mxu0 0.0
    %809 = vmatpush1.xpose.msra.mxu0 0.0
    %810 = vmatprep.subr.mxu0 0.0
    %811 = vmatpush1.xpose.msra.mxu0 0.0
    %812 = vmatprep.subr.mxu0 0.0
    %813 = vmatpush1.xpose.msra.mxu0 0.0
    %814 = vmatprep.subr.mxu0 0.0
    %815 = vmatpush1.xpose.msra.mxu0 0.0
    %816 = vmatprep.subr.mxu0 0.0
    %817 = vmatpush1.xpose.msra.mxu0 0.0
    %818 = vmatprep.mubr.f32.mxu0 0.0
    %819 = vmatmul.mubr.f32.gmra.mrb[0].mxu0 %v749
    %v820 = vpop.f32.mrb[0].mxu0
    %v821 = vadd.f32 0.0, %v820
    %v822 = vpop.f32.mrb[0].mxu0
    %823 = vdwg.mxu0
    %v824 = vsel %vm97, %v298, 0
    %v827 = vsel %vm97, %v84, 0
    %829 = vmatprep.subr.mxu0 0.0
    %830 = vmatpush1.xpose.msra.mxu0 %v827
    %831 = vmatprep.subr.mxu0 0.0
    %832 = vmatpush1.xpose.msra.mxu0 0.0
    %833 = vmatprep.subr.mxu0 0.0
    %834 = vmatpush1.xpose.msra.mxu0 0.0
    %835 = vmatprep.subr.mxu0 0.0
    %836 = vmatpush1.xpose.msra.mxu0 0.0
    %837 = vmatprep.subr.mxu0 0.0
    %838 = vmatpush1.xpose.msra.mxu0 0.0
    %839 = vmatprep.subr.mxu0 0.0
    %840 = vmatpush1.xpose.msra.mxu0 0.0
    %841 = vmatprep.subr.mxu0 0.0
    %842 = vmatpush1.xpose.msra.mxu0 0.0
    %843 = vmatprep.subr.mxu0 0.0
    %844 = vmatpush1.xpose.msra.mxu0 0.0
    %845 = vmatprep.subr.mxu0 0.0
    %846 = vmatpush1.xpose.msra.mxu0 0.0
    %847 = vmatprep.subr.mxu0 0.0
    %848 = vmatpush1.xpose.msra.mxu0 0.0
    %849 = vmatprep.subr.mxu0 0.0
    %850 = vmatpush1.xpose.msra.mxu0 0.0
    %851 = vmatprep.subr.mxu0 0.0
    %852 = vmatpush1.xpose.msra.mxu0 0.0
    %853 = vmatprep.subr.mxu0 0.0
    %854 = vmatpush1.xpose.msra.mxu0 0.0
    %855 = vmatprep.subr.mxu0 0.0
    %856 = vmatpush1.xpose.msra.mxu0 0.0
    %857 = vmatprep.subr.mxu0 0.0
    %858 = vmatpush1.xpose.msra.mxu0 0.0
    %859 = vmatprep.subr.mxu0 0.0
    %860 = vmatpush1.xpose.msra.mxu0 0.0
    %861 = vmatprep.subr.mxu0 0.0
    %862 = vmatpush1.xpose.msra.mxu0 0.0
    %863 = vmatprep.subr.mxu0 0.0
    %864 = vmatpush1.xpose.msra.mxu0 0.0
    %865 = vmatprep.subr.mxu0 0.0
    %866 = vmatpush1.xpose.msra.mxu0 0.0
    %867 = vmatprep.subr.mxu0 0.0
    %868 = vmatpush1.xpose.msra.mxu0 0.0
    %869 = vmatprep.subr.mxu0 0.0
    %870 = vmatpush1.xpose.msra.mxu0 0.0
    %871 = vmatprep.subr.mxu0 0.0
    %872 = vmatpush1.xpose.msra.mxu0 0.0
    %873 = vmatprep.subr.mxu0 0.0
    %874 = vmatpush1.xpose.msra.mxu0 0.0
    %875 = vmatprep.subr.mxu0 0.0
    %876 = vmatpush1.xpose.msra.mxu0 0.0
    %877 = vmatprep.subr.mxu0 0.0
    %878 = vmatpush1.xpose.msra.mxu0 0.0
    %879 = vmatprep.subr.mxu0 0.0
    %880 = vmatpush1.xpose.msra.mxu0 0.0
    %881 = vmatprep.subr.mxu0 0.0
    %882 = vmatpush1.xpose.msra.mxu0 0.0
    %883 = vmatprep.subr.mxu0 0.0
    %884 = vmatpush1.xpose.msra.mxu0 0.0
    %885 = vmatprep.subr.mxu0 0.0
    %886 = vmatpush1.xpose.msra.mxu0 0.0
    %887 = vmatprep.subr.mxu0 0.0
    %888 = vmatpush1.xpose.msra.mxu0 0.0
    %889 = vmatprep.subr.mxu0 0.0
    %890 = vmatpush1.xpose.msra.mxu0 0.0
    %891 = vmatprep.subr.mxu0 0.0
    %892 = vmatpush1.xpose.msra.mxu0 0.0
    %893 = vmatprep.mubr.f32.mxu0 0.0
    %894 = vmatmul.mubr.f32.gmra.mrb[0].mxu0 %v824
    %v895 = vpop.f32.mrb[0].mxu0
    %v896 = vadd.f32 0.0, %v895
    %v897 = vpop.f32.mrb[0].mxu0
    %898 = vdwg.mxu0
    %v907 = vrot.slane %v446, 7
    %vm908 = vcmask 1041409
    %v909 = vsel %vm908, %v907, %v371
    %v910 = vrot.slane %v521, 6
    %vm911 = vcmask 1042434
    %v912 = vsel %vm911, %v910, %v909
    %v913 = vrot.slane %v596, 5
    %vm914 = vcmask 1043459
    %v915 = vsel %vm914, %v913, %v912
    %v916 = vrot.slane %v671, 4
    %vm917 = vcmask 1044484
    %v918 = vsel %vm917, %v916, %v915
    %v919 = vrot.slane %v746, 3
    %vm920 = vcmask 1045509
    %v921 = vsel %vm920, %v919, %v918
    %v922 = vrot.slane %v821, 2
    %vm923 = vcmask 1046534
    %v924 = vsel %vm923, %v922, %v921
    %v925 = vrot.slane %v896, 1
    %vm926 = vcmask 1047559
    %v927 = vsel %vm926, %v925, %v924
    %vm929 = vcmask 64512
    %v930 = vsel %vm929, %v927, -inf
    %931 = vmax.xlane.f32.xlu0 %v930
    %v932 = vpop.xlane.xlu0 %931
    %v934 = vrot.slane %v932, 1
    %v935 = vrot.slane %v932, 2
    %v936 = vrot.slane %v932, 3
    %v937 = vrot.slane %v932, 4
    %v938 = vrot.slane %v932, 5
    %v939 = vrot.slane %v932, 6
    %v940 = vrot.slane %v932, 7
    %v949 = vsub.f32 %v371, %v932
    %v950 = vsub.f32 %v446, %v934
    %v951 = vsub.f32 %v521, %v935
    %v952 = vsub.f32 %v596, %v936
    %v953 = vsub.f32 %v671, %v937
    %v954 = vsub.f32 %v746, %v938
    %v955 = vsub.f32 %v821, %v939
    %v956 = vsub.f32 %v896, %v940
    %v957 = vmul.f32 %v949, 1.442695
    %v958 = vpow.pop %v957
    %v959 = vmul.f32 %v950, 1.442695
    %v960 = vpow.pop %v959
    %v961 = vmul.f32 %v951, 1.442695
    %v962 = vpow.pop %v961
    %v963 = vmul.f32 %v952, 1.442695
    %v964 = vpow.pop %v963
    %v965 = vmul.f32 %v953, 1.442695
    %v966 = vpow.pop %v965
    %v967 = vmul.f32 %v954, 1.442695
    %v968 = vpow.pop %v967
    %v969 = vmul.f32 %v955, 1.442695
    %v970 = vpow.pop %v969
    %v971 = vmul.f32 %v956, 1.442695
    %v972 = vpow.pop %v971
    %v981 = vrot.slane %v960, 7
    %v982 = vsel %vm908, %v981, %v958
    %v983 = vrot.slane %v962, 6
    %v984 = vsel %vm911, %v983, %v982
    %v985 = vrot.slane %v964, 5
    %v986 = vsel %vm914, %v985, %v984
    %v987 = vrot.slane %v966, 4
    %v988 = vsel %vm917, %v987, %v986
    %v989 = vrot.slane %v968, 3
    %v990 = vsel %vm920, %v989, %v988
    %v991 = vrot.slane %v970, 2
    %v992 = vsel %vm923, %v991, %v990
    %v993 = vrot.slane %v972, 1
    %v994 = vsel %vm926, %v993, %v992
    %v996 = vsel %vm929, %v994, 0.0
    %997 = vadd.xlane.f32.xlu0 %v996
    %v998 = vpop.xlane.xlu0 %997
    %v999 = vrcp.pop %v998
    %v1001 = vrot.slane %v999, 1
    %v1002 = vrot.slane %v999, 2
    %v1003 = vrot.slane %v999, 3
    %v1004 = vrot.slane %v999, 4
    %v1005 = vrot.slane %v999, 5
    %v1006 = vrot.slane %v999, 6
    %v1007 = vrot.slane %v999, 7
    %v1016 = vmul.f32 %v958, %v999
    %v1017 = vmul.f32 %v960, %v1001
    %v1018 = vmul.f32 %v962, %v1002
    %v1019 = vmul.f32 %v964, %v1003
    %v1020 = vmul.f32 %v966, %v1004
    %v1021 = vmul.f32 %v968, %v1005
    %v1022 = vmul.f32 %v970, %v1006
    %v1023 = vmul.f32 %v972, %v1007
    %v1025 = vsel %vm929, %v1016, 0
    %1027 = vmatprep.subr.mxu0 0.0
    %1028 = vmatpush1.msra.mxu0 %v77
    %1029 = vmatprep.subr.mxu0 0.0
    %1030 = vmatpush1.msra.mxu0 0.0
    %1031 = vmatprep.subr.mxu0 0.0
    %1032 = vmatpush1.msra.mxu0 0.0
    %1033 = vmatprep.subr.mxu0 0.0
    %1034 = vmatpush1.msra.mxu0 0.0
    %1035 = vmatprep.subr.mxu0 0.0
    %1036 = vmatpush1.msra.mxu0 0.0
    %1037 = vmatprep.subr.mxu0 0.0
    %1038 = vmatpush1.msra.mxu0 0.0
    %1039 = vmatprep.subr.mxu0 0.0
    %1040 = vmatpush1.msra.mxu0 0.0
    %1041 = vmatprep.subr.mxu0 0.0
    %1042 = vmatpush1.msra.mxu0 0.0
    %1043 = vmatprep.subr.mxu0 0.0
    %1044 = vmatpush1.msra.mxu0 0.0
    %1045 = vmatprep.subr.mxu0 0.0
    %1046 = vmatpush1.msra.mxu0 0.0
    %1047 = vmatprep.subr.mxu0 0.0
    %1048 = vmatpush1.msra.mxu0 0.0
    %1049 = vmatprep.subr.mxu0 0.0
    %1050 = vmatpush1.msra.mxu0 0.0
    %1051 = vmatprep.subr.mxu0 0.0
    %1052 = vmatpush1.msra.mxu0 0.0
    %1053 = vmatprep.subr.mxu0 0.0
    %1054 = vmatpush1.msra.mxu0 0.0
    %1055 = vmatprep.subr.mxu0 0.0
    %1056 = vmatpush1.msra.mxu0 0.0
    %1057 = vmatprep.subr.mxu0 0.0
    %1058 = vmatpush1.msra.mxu0 0.0
    %1059 = vmatprep.subr.mxu0 0.0
    %1060 = vmatpush1.msra.mxu0 0.0
    %1061 = vmatprep.subr.mxu0 0.0
    %1062 = vmatpush1.msra.mxu0 0.0
    %1063 = vmatprep.subr.mxu0 0.0
    %1064 = vmatpush1.msra.mxu0 0.0
    %1065 = vmatprep.subr.mxu0 0.0
    %1066 = vmatpush1.msra.mxu0 0.0
    %1067 = vmatprep.subr.mxu0 0.0
    %1068 = vmatpush1.msra.mxu0 0.0
    %1069 = vmatprep.subr.mxu0 0.0
    %1070 = vmatpush1.msra.mxu0 0.0
    %1071 = vmatprep.subr.mxu0 0.0
    %1072 = vmatpush1.msra.mxu0 0.0
    %1073 = vmatprep.subr.mxu0 0.0
    %1074 = vmatpush1.msra.mxu0 0.0
    %1075 = vmatprep.subr.mxu0 0.0
    %1076 = vmatpush1.msra.mxu0 0.0
    %1077 = vmatprep.subr.mxu0 0.0
    %1078 = vmatpush1.msra.mxu0 0.0
    %1079 = vmatprep.subr.mxu0 0.0
    %1080 = vmatpush1.msra.mxu0 0.0
    %1081 = vmatprep.subr.mxu0 0.0
    %1082 = vmatpush1.msra.mxu0 0.0
    %1083 = vmatprep.subr.mxu0 0.0
    %1084 = vmatpush1.msra.mxu0 0.0
    %1085 = vmatprep.subr.mxu0 0.0
    %1086 = vmatpush1.msra.mxu0 0.0
    %1087 = vmatprep.subr.mxu0 0.0
    %1088 = vmatpush1.msra.mxu0 0.0
    %1089 = vmatprep.subr.mxu0 0.0
    %1090 = vmatpush1.msra.mxu0 0.0
    %1091 = vmatprep.mubr.f32.mxu0 0.0
    %1092 = vmatmul.mubr.f32.gmra.mrb[0].mxu0 %v1025
    %v1093 = vpop.f32.mrb[0].mxu0
    %v1094 = vadd.f32 0.0, %v1093
    %v1095 = vpop.f32.mrb[0].mxu0
    %1096 = vdwg.mxu0
    %v1098 = vsel %vm929, %v1017, 0
    %1100 = vmatprep.subr.mxu0 0.0
    %1101 = vmatpush1.msra.mxu0 %v78
    %1102 = vmatprep.subr.mxu0 0.0
    %1103 = vmatpush1.msra.mxu0 0.0
    %1104 = vmatprep.subr.mxu0 0.0
    %1105 = vmatpush1.msra.mxu0 0.0
    %1106 = vmatprep.subr.mxu0 0.0
    %1107 = vmatpush1.msra.mxu0 0.0
    %1108 = vmatprep.subr.mxu0 0.0
    %1109 = vmatpush1.msra.mxu0 0.0
    %1110 = vmatprep.subr.mxu0 0.0
    %1111 = vmatpush1.msra.mxu0 0.0
    %1112 = vmatprep.subr.mxu0 0.0
    %1113 = vmatpush1.msra.mxu0 0.0
    %1114 = vmatprep.subr.mxu0 0.0
    %1115 = vmatpush1.msra.mxu0 0.0
    %1116 = vmatprep.subr.mxu0 0.0
    %1117 = vmatpush1.msra.mxu0 0.0
    %1118 = vmatprep.subr.mxu0 0.0
    %1119 = vmatpush1.msra.mxu0 0.0
    %1120 = vmatprep.subr.mxu0 0.0
    %1121 = vmatpush1.msra.mxu0 0.0
    %1122 = vmatprep.subr.mxu0 0.0
    %1123 = vmatpush1.msra.mxu0 0.0
    %1124 = vmatprep.subr.mxu0 0.0
    %1125 = vmatpush1.msra.mxu0 0.0
    %1126 = vmatprep.subr.mxu0 0.0
    %1127 = vmatpush1.msra.mxu0 0.0
    %1128 = vmatprep.subr.mxu0 0.0
    %1129 = vmatpush1.msra.mxu0 0.0
    %1130 = vmatprep.subr.mxu0 0.0
    %1131 = vmatpush1.msra.mxu0 0.0
    %1132 = vmatprep.subr.mxu0 0.0
    %1133 = vmatpush1.msra.mxu0 0.0
    %1134 = vmatprep.subr.mxu0 0.0
    %1135 = vmatpush1.msra.mxu0 0.0
    %1136 = vmatprep.subr.mxu0 0.0
    %1137 = vmatpush1.msra.mxu0 0.0
    %1138 = vmatprep.subr.mxu0 0.0
    %1139 = vmatpush1.msra.mxu0 0.0
    %1140 = vmatprep.subr.mxu0 0.0
    %1141 = vmatpush1.msra.mxu0 0.0
    %1142 = vmatprep.subr.mxu0 0.0
    %1143 = vmatpush1.msra.mxu0 0.0
    %1144 = vmatprep.subr.mxu0 0.0
    %1145 = vmatpush1.msra.mxu0 0.0
    %1146 = vmatprep.subr.mxu0 0.0
    %1147 = vmatpush1.msra.mxu0 0.0
    %1148 = vmatprep.subr.mxu0 0.0
    %1149 = vmatpush1.msra.mxu0 0.0
    %1150 = vmatprep.subr.mxu0 0.0
    %1151 = vmatpush1.msra.mxu0 0.0
    %1152 = vmatprep.subr.mxu0 0.0
    %1153 = vmatpush1.msra.mxu0 0.0
    %1154 = vmatprep.subr.mxu0 0.0
    %1155 = vmatpush1.msra.mxu0 0.0
    %1156 = vmatprep.subr.mxu0 0.0
    %1157 = vmatpush1.msra.mxu0 0.0
    %1158 = vmatprep.subr.mxu0 0.0
    %1159 = vmatpush1.msra.mxu0 0.0
    %1160 = vmatprep.subr.mxu0 0.0
    %1161 = vmatpush1.msra.mxu0 0.0
    %1162 = vmatprep.subr.mxu0 0.0
    %1163 = vmatpush1.msra.mxu0 0.0
    %1164 = vmatprep.mubr.f32.mxu0 0.0
    %1165 = vmatmul.mubr.f32.gmra.mrb[0].mxu0 %v1098
    %v1166 = vpop.f32.mrb[0].mxu0
    %v1167 = vadd.f32 0.0, %v1166
    %v1168 = vpop.f32.mrb[0].mxu0
    %1169 = vdwg.mxu0
    %v1171 = vsel %vm929, %v1018, 0
    %1173 = vmatprep.subr.mxu0 0.0
    %1174 = vmatpush1.msra.mxu0 %v79
    %1175 = vmatprep.subr.mxu0 0.0
    %1176 = vmatpush1.msra.mxu0 0.0
    %1177 = vmatprep.subr.mxu0 0.0
    %1178 = vmatpush1.msra.mxu0 0.0
    %1179 = vmatprep.subr.mxu0 0.0
    %1180 = vmatpush1.msra.mxu0 0.0
    %1181 = vmatprep.subr.mxu0 0.0
    %1182 = vmatpush1.msra.mxu0 0.0
    %1183 = vmatprep.subr.mxu0 0.0
    %1184 = vmatpush1.msra.mxu0 0.0
    %1185 = vmatprep.subr.mxu0 0.0
    %1186 = vmatpush1.msra.mxu0 0.0
    %1187 = vmatprep.subr.mxu0 0.0
    %1188 = vmatpush1.msra.mxu0 0.0
    %1189 = vmatprep.subr.mxu0 0.0
    %1190 = vmatpush1.msra.mxu0 0.0
    %1191 = vmatprep.subr.mxu0 0.0
    %1192 = vmatpush1.msra.mxu0 0.0
    %1193 = vmatprep.subr.mxu0 0.0
    %1194 = vmatpush1.msra.mxu0 0.0
    %1195 = vmatprep.subr.mxu0 0.0
    %1196 = vmatpush1.msra.mxu0 0.0
    %1197 = vmatprep.subr.mxu0 0.0
    %1198 = vmatpush1.msra.mxu0 0.0
    %1199 = vmatprep.subr.mxu0 0.0
    %1200 = vmatpush1.msra.mxu0 0.0
    %1201 = vmatprep.subr.mxu0 0.0
    %1202 = vmatpush1.msra.mxu0 0.0
    %1203 = vmatprep.subr.mxu0 0.0
    %1204 = vmatpush1.msra.mxu0 0.0
    %1205 = vmatprep.subr.mxu0 0.0
    %1206 = vmatpush1.msra.mxu0 0.0
    %1207 = vmatprep.subr.mxu0 0.0
    %1208 = vmatpush1.msra.mxu0 0.0
    %1209 = vmatprep.subr.mxu0 0.0
    %1210 = vmatpush1.msra.mxu0 0.0
    %1211 = vmatprep.subr.mxu0 0.0
    %1212 = vmatpush1.msra.mxu0 0.0
    %1213 = vmatprep.subr.mxu0 0.0
    %1214 = vmatpush1.msra.mxu0 0.0
    %1215 = vmatprep.subr.mxu0 0.0
    %1216 = vmatpush1.msra.mxu0 0.0
    %1217 = vmatprep.subr.mxu0 0.0
    %1218 = vmatpush1.msra.mxu0 0.0
    %1219 = vmatprep.subr.mxu0 0.0
    %1220 = vmatpush1.msra.mxu0 0.0
    %1221 = vmatprep.subr.mxu0 0.0
    %1222 = vmatpush1.msra.mxu0 0.0
    %1223 = vmatprep.subr.mxu0 0.0
    %1224 = vmatpush1.msra.mxu0 0.0
    %1225 = vmatprep.subr.mxu0 0.0
    %1226 = vmatpush1.msra.mxu0 0.0
    %1227 = vmatprep.subr.mxu0 0.0
    %1228 = vmatpush1.msra.mxu0 0.0
    %1229 = vmatprep.subr.mxu0 0.0
    %1230 = vmatpush1.msra.mxu0 0.0
    %1231 = vmatprep.subr.mxu0 0.0
    %1232 = vmatpush1.msra.mxu0 0.0
    %1233 = vmatprep.subr.mxu0 0.0
    %1234 = vmatpush1.msra.mxu0 0.0
    %1235 = vmatprep.subr.mxu0 0.0
    %1236 = vmatpush1.msra.mxu0 0.0
    %1237 = vmatprep.mubr.f32.mxu0 0.0
    %1238 = vmatmul.mubr.f32.gmra.mrb[0].mxu0 %v1171
    %v1239 = vpop.f32.mrb[0].mxu0
    %v1240 = vadd.f32 0.0, %v1239
    %v1241 = vpop.f32.mrb[0].mxu0
    %1242 = vdwg.mxu0
    %v1244 = vsel %vm929, %v1019, 0
    %1246 = vmatprep.subr.mxu0 0.0
    %1247 = vmatpush1.msra.mxu0 %v80
    %1248 = vmatprep.subr.mxu0 0.0
    %1249 = vmatpush1.msra.mxu0 0.0
    %1250 = vmatprep.subr.mxu0 0.0
    %1251 = vmatpush1.msra.mxu0 0.0
    %1252 = vmatprep.subr.mxu0 0.0
    %1253 = vmatpush1.msra.mxu0 0.0
    %1254 = vmatprep.subr.mxu0 0.0
    %1255 = vmatpush1.msra.mxu0 0.0
    %1256 = vmatprep.subr.mxu0 0.0
    %1257 = vmatpush1.msra.mxu0 0.0
    %1258 = vmatprep.subr.mxu0 0.0
    %1259 = vmatpush1.msra.mxu0 0.0
    %1260 = vmatprep.subr.mxu0 0.0
    %1261 = vmatpush1.msra.mxu0 0.0
    %1262 = vmatprep.subr.mxu0 0.0
    %1263 = vmatpush1.msra.mxu0 0.0
    %1264 = vmatprep.subr.mxu0 0.0
    %1265 = vmatpush1.msra.mxu0 0.0
    %1266 = vmatprep.subr.mxu0 0.0
    %1267 = vmatpush1.msra.mxu0 0.0
    %1268 = vmatprep.subr.mxu0 0.0
    %1269 = vmatpush1.msra.mxu0 0.0
    %1270 = vmatprep.subr.mxu0 0.0
    %1271 = vmatpush1.msra.mxu0 0.0
    %1272 = vmatprep.subr.mxu0 0.0
    %1273 = vmatpush1.msra.mxu0 0.0
    %1274 = vmatprep.subr.mxu0 0.0
    %1275 = vmatpush1.msra.mxu0 0.0
    %1276 = vmatprep.subr.mxu0 0.0
    %1277 = vmatpush1.msra.mxu0 0.0
    %1278 = vmatprep.subr.mxu0 0.0
    %1279 = vmatpush1.msra.mxu0 0.0
    %1280 = vmatprep.subr.mxu0 0.0
    %1281 = vmatpush1.msra.mxu0 0.0
    %1282 = vmatprep.subr.mxu0 0.0
    %1283 = vmatpush1.msra.mxu0 0.0
    %1284 = vmatprep.subr.mxu0 0.0
    %1285 = vmatpush1.msra.mxu0 0.0
    %1286 = vmatprep.subr.mxu0 0.0
    %1287 = vmatpush1.msra.mxu0 0.0
    %1288 = vmatprep.subr.mxu0 0.0
    %1289 = vmatpush1.msra.mxu0 0.0
    %1290 = vmatprep.subr.mxu0 0.0
    %1291 = vmatpush1.msra.mxu0 0.0
    %1292 = vmatprep.subr.mxu0 0.0
    %1293 = vmatpush1.msra.mxu0 0.0
    %1294 = vmatprep.subr.mxu0 0.0
    %1295 = vmatpush1.msra.mxu0 0.0
    %1296 = vmatprep.subr.mxu0 0.0
    %1297 = vmatpush1.msra.mxu0 0.0
    %1298 = vmatprep.subr.mxu0 0.0
    %1299 = vmatpush1.msra.mxu0 0.0
    %1300 = vmatprep.subr.mxu0 0.0
    %1301 = vmatpush1.msra.mxu0 0.0
    %1302 = vmatprep.subr.mxu0 0.0
    %1303 = vmatpush1.msra.mxu0 0.0
    %1304 = vmatprep.subr.mxu0 0.0
    %1305 = vmatpush1.msra.mxu0 0.0
    %1306 = vmatprep.subr.mxu0 0.0
    %1307 = vmatpush1.msra.mxu0 0.0
    %1308 = vmatprep.subr.mxu0 0.0
    %1309 = vmatpush1.msra.mxu0 0.0
    %1310 = vmatprep.mubr.f32.mxu0 0.0
    %1311 = vmatmul.mubr.f32.gmra.mrb[0].mxu0 %v1244
    %v1312 = vpop.f32.mrb[0].mxu0
    %v1313 = vadd.f32 0.0, %v1312
    %v1314 = vpop.f32.mrb[0].mxu0
    %1315 = vdwg.mxu0
    %v1317 = vsel %vm929, %v1020, 0
    %1319 = vmatprep.subr.mxu0 0.0
    %1320 = vmatpush1.msra.mxu0 %v81
    %1321 = vmatprep.subr.mxu0 0.0
    %1322 = vmatpush1.msra.mxu0 0.0
    %1323 = vmatprep.subr.mxu0 0.0
    %1324 = vmatpush1.msra.mxu0 0.0
    %1325 = vmatprep.subr.mxu0 0.0
    %1326 = vmatpush1.msra.mxu0 0.0
    %1327 = vmatprep.subr.mxu0 0.0
    %1328 = vmatpush1.msra.mxu0 0.0
    %1329 = vmatprep.subr.mxu0 0.0
    %1330 = vmatpush1.msra.mxu0 0.0
    %1331 = vmatprep.subr.mxu0 0.0
    %1332 = vmatpush1.msra.mxu0 0.0
    %1333 = vmatprep.subr.mxu0 0.0
    %1334 = vmatpush1.msra.mxu0 0.0
    %1335 = vmatprep.subr.mxu0 0.0
    %1336 = vmatpush1.msra.mxu0 0.0
    %1337 = vmatprep.subr.mxu0 0.0
    %1338 = vmatpush1.msra.mxu0 0.0
    %1339 = vmatprep.subr.mxu0 0.0
    %1340 = vmatpush1.msra.mxu0 0.0
    %1341 = vmatprep.subr.mxu0 0.0
    %1342 = vmatpush1.msra.mxu0 0.0
    %1343 = vmatprep.subr.mxu0 0.0
    %1344 = vmatpush1.msra.mxu0 0.0
    %1345 = vmatprep.subr.mxu0 0.0
    %1346 = vmatpush1.msra.mxu0 0.0
    %1347 = vmatprep.subr.mxu0 0.0
    %1348 = vmatpush1.msra.mxu0 0.0
    %1349 = vmatprep.subr.mxu0 0.0
    %1350 = vmatpush1.msra.mxu0 0.0
    %1351 = vmatprep.subr.mxu0 0.0
    %1352 = vmatpush1.msra.mxu0 0.0
    %1353 = vmatprep.subr.mxu0 0.0
    %1354 = vmatpush1.msra.mxu0 0.0
    %1355 = vmatprep.subr.mxu0 0.0
    %1356 = vmatpush1.msra.mxu0 0.0
    %1357 = vmatprep.subr.mxu0 0.0
    %1358 = vmatpush1.msra.mxu0 0.0
    %1359 = vmatprep.subr.mxu0 0.0
    %1360 = vmatpush1.msra.mxu0 0.0
    %1361 = vmatprep.subr.mxu0 0.0
    %1362 = vmatpush1.msra.mxu0 0.0
    %1363 = vmatprep.subr.mxu0 0.0
    %1364 = vmatpush1.msra.mxu0 0.0
    %1365 = vmatprep.subr.mxu0 0.0
    %1366 = vmatpush1.msra.mxu0 0.0
    %1367 = vmatprep.subr.mxu0 0.0
    %1368 = vmatpush1.msra.mxu0 0.0
    %1369 = vmatprep.subr.mxu0 0.0
    %1370 = vmatpush1.msra.mxu0 0.0
    %1371 = vmatprep.subr.mxu0 0.0
    %1372 = vmatpush1.msra.mxu0 0.0
    %1373 = vmatprep.subr.mxu0 0.0
    %1374 = vmatpush1.msra.mxu0 0.0
    %1375 = vmatprep.subr.mxu0 0.0
    %1376 = vmatpush1.msra.mxu0 0.0
    %1377 = vmatprep.subr.mxu0 0.0
    %1378 = vmatpush1.msra.mxu0 0.0
    %1379 = vmatprep.subr.mxu0 0.0
    %1380 = vmatpush1.msra.mxu0 0.0
    %1381 = vmatprep.subr.mxu0 0.0
    %1382 = vmatpush1.msra.mxu0 0.0
    %1383 = vmatprep.mubr.f32.mxu0 0.0
    %1384 = vmatmul.mubr.f32.gmra.mrb[0].mxu0 %v1317
    %v1385 = vpop.f32.mrb[0].mxu0
    %v1386 = vadd.f32 0.0, %v1385
    %v1387 = vpop.f32.mrb[0].mxu0
    %1388 = vdwg.mxu0
    %v1390 = vsel %vm929, %v1021, 0
    %1392 = vmatprep.subr.mxu0 0.0
    %1393 = vmatpush1.msra.mxu0 %v82
    %1394 = vmatprep.subr.mxu0 0.0
    %1395 = vmatpush1.msra.mxu0 0.0
    %1396 = vmatprep.subr.mxu0 0.0
    %1397 = vmatpush1.msra.mxu0 0.0
    %1398 = vmatprep.subr.mxu0 0.0
    %1399 = vmatpush1.msra.mxu0 0.0
    %1400 = vmatprep.subr.mxu0 0.0
    %1401 = vmatpush1.msra.mxu0 0.0
    %1402 = vmatprep.subr.mxu0 0.0
    %1403 = vmatpush1.msra.mxu0 0.0
    %1404 = vmatprep.subr.mxu0 0.0
    %1405 = vmatpush1.msra.mxu0 0.0
    %1406 = vmatprep.subr.mxu0 0.0
    %1407 = vmatpush1.msra.mxu0 0.0
    %1408 = vmatprep.subr.mxu0 0.0
    %1409 = vmatpush1.msra.mxu0 0.0
    %1410 = vmatprep.subr.mxu0 0.0
    %1411 = vmatpush1.msra.mxu0 0.0
    %1412 = vmatprep.subr.mxu0 0.0
    %1413 = vmatpush1.msra.mxu0 0.0
    %1414 = vmatprep.subr.mxu0 0.0
    %1415 = vmatpush1.msra.mxu0 0.0
    %1416 = vmatprep.subr.mxu0 0.0
    %1417 = vmatpush1.msra.mxu0 0.0
    %1418 = vmatprep.subr.mxu0 0.0
    %1419 = vmatpush1.msra.mxu0 0.0
    %1420 = vmatprep.subr.mxu0 0.0
    %1421 = vmatpush1.msra.mxu0 0.0
    %1422 = vmatprep.subr.mxu0 0.0
    %1423 = vmatpush1.msra.mxu0 0.0
    %1424 = vmatprep.subr.mxu0 0.0
    %1425 = vmatpush1.msra.mxu0 0.0
    %1426 = vmatprep.subr.mxu0 0.0
    %1427 = vmatpush1.msra.mxu0 0.0
    %1428 = vmatprep.subr.mxu0 0.0
    %1429 = vmatpush1.msra.mxu0 0.0
    %1430 = vmatprep.subr.mxu0 0.0
    %1431 = vmatpush1.msra.mxu0 0.0
    %1432 = vmatprep.subr.mxu0 0.0
    %1433 = vmatpush1.msra.mxu0 0.0
    %1434 = vmatprep.subr.mxu0 0.0
    %1435 = vmatpush1.msra.mxu0 0.0
    %1436 = vmatprep.subr.mxu0 0.0
    %1437 = vmatpush1.msra.mxu0 0.0
    %1438 = vmatprep.subr.mxu0 0.0
    %1439 = vmatpush1.msra.mxu0 0.0
    %1440 = vmatprep.subr.mxu0 0.0
    %1441 = vmatpush1.msra.mxu0 0.0
    %1442 = vmatprep.subr.mxu0 0.0
    %1443 = vmatpush1.msra.mxu0 0.0
    %1444 = vmatprep.subr.mxu0 0.0
    %1445 = vmatpush1.msra.mxu0 0.0
    %1446 = vmatprep.subr.mxu0 0.0
    %1447 = vmatpush1.msra.mxu0 0.0
    %1448 = vmatprep.subr.mxu0 0.0
    %1449 = vmatpush1.msra.mxu0 0.0
    %1450 = vmatprep.subr.mxu0 0.0
    %1451 = vmatpush1.msra.mxu0 0.0
    %1452 = vmatprep.subr.mxu0 0.0
    %1453 = vmatpush1.msra.mxu0 0.0
    %1454 = vmatprep.subr.mxu0 0.0
    %1455 = vmatpush1.msra.mxu0 0.0
    %1456 = vmatprep.mubr.f32.mxu0 0.0
    %1457 = vmatmul.mubr.f32.gmra.mrb[0].mxu0 %v1390
    %v1458 = vpop.f32.mrb[0].mxu0
    %v1459 = vadd.f32 0.0, %v1458
    %v1460 = vpop.f32.mrb[0].mxu0
    %1461 = vdwg.mxu0
    %v1463 = vsel %vm929, %v1022, 0
    %1465 = vmatprep.subr.mxu0 0.0
    %1466 = vmatpush1.msra.mxu0 %v83
    %1467 = vmatprep.subr.mxu0 0.0
    %1468 = vmatpush1.msra.mxu0 0.0
    %1469 = vmatprep.subr.mxu0 0.0
    %1470 = vmatpush1.msra.mxu0 0.0
    %1471 = vmatprep.subr.mxu0 0.0
    %1472 = vmatpush1.msra.mxu0 0.0
    %1473 = vmatprep.subr.mxu0 0.0
    %1474 = vmatpush1.msra.mxu0 0.0
    %1475 = vmatprep.subr.mxu0 0.0
    %1476 = vmatpush1.msra.mxu0 0.0
    %1477 = vmatprep.subr.mxu0 0.0
    %1478 = vmatpush1.msra.mxu0 0.0
    %1479 = vmatprep.subr.mxu0 0.0
    %1480 = vmatpush1.msra.mxu0 0.0
    %1481 = vmatprep.subr.mxu0 0.0
    %1482 = vmatpush1.msra.mxu0 0.0
    %1483 = vmatprep.subr.mxu0 0.0
    %1484 = vmatpush1.msra.mxu0 0.0
    %1485 = vmatprep.subr.mxu0 0.0
    %1486 = vmatpush1.msra.mxu0 0.0
    %1487 = vmatprep.subr.mxu0 0.0
    %1488 = vmatpush1.msra.mxu0 0.0
    %1489 = vmatprep.subr.mxu0 0.0
    %1490 = vmatpush1.msra.mxu0 0.0
    %1491 = vmatprep.subr.mxu0 0.0
    %1492 = vmatpush1.msra.mxu0 0.0
    %1493 = vmatprep.subr.mxu0 0.0
    %1494 = vmatpush1.msra.mxu0 0.0
    %1495 = vmatprep.subr.mxu0 0.0
    %1496 = vmatpush1.msra.mxu0 0.0
    %1497 = vmatprep.subr.mxu0 0.0
    %1498 = vmatpush1.msra.mxu0 0.0
    %1499 = vmatprep.subr.mxu0 0.0
    %1500 = vmatpush1.msra.mxu0 0.0
    %1501 = vmatprep.subr.mxu0 0.0
    %1502 = vmatpush1.msra.mxu0 0.0
    %1503 = vmatprep.subr.mxu0 0.0
    %1504 = vmatpush1.msra.mxu0 0.0
    %1505 = vmatprep.subr.mxu0 0.0
    %1506 = vmatpush1.msra.mxu0 0.0
    %1507 = vmatprep.subr.mxu0 0.0
    %1508 = vmatpush1.msra.mxu0 0.0
    %1509 = vmatprep.subr.mxu0 0.0
    %1510 = vmatpush1.msra.mxu0 0.0
    %1511 = vmatprep.subr.mxu0 0.0
    %1512 = vmatpush1.msra.mxu0 0.0
    %1513 = vmatprep.subr.mxu0 0.0
    %1514 = vmatpush1.msra.mxu0 0.0
    %1515 = vmatprep.subr.mxu0 0.0
    %1516 = vmatpush1.msra.mxu0 0.0
    %1517 = vmatprep.subr.mxu0 0.0
    %1518 = vmatpush1.msra.mxu0 0.0
    %1519 = vmatprep.subr.mxu0 0.0
    %1520 = vmatpush1.msra.mxu0 0.0
    %1521 = vmatprep.subr.mxu0 0.0
    %1522 = vmatpush1.msra.mxu0 0.0
    %1523 = vmatprep.subr.mxu0 0.0
    %1524 = vmatpush1.msra.mxu0 0.0
    %1525 = vmatprep.subr.mxu0 0.0
    %1526 = vmatpush1.msra.mxu0 0.0
    %1527 = vmatprep.subr.mxu0 0.0
    %1528 = vmatpush1.msra.mxu0 0.0
    %1529 = vmatprep.mubr.f32.mxu0 0.0
    %1530 = vmatmul.mubr.f32.gmra.mrb[0].mxu0 %v1463
    %v1531 = vpop.f32.mrb[0].mxu0
    %v1532 = vadd.f32 0.0, %v1531
    %v1533 = vpop.f32.mrb[0].mxu0
    %1534 = vdwg.mxu0
    %v1536 = vsel %vm929, %v1023, 0
    %1538 = vmatprep.subr.mxu0 0.0
    %1539 = vmatpush1.msra.mxu0 %v84
    %1540 = vmatprep.subr.mxu0 0.0
    %1541 = vmatpush1.msra.mxu0 0.0
    %1542 = vmatprep.subr.mxu0 0.0
    %1543 = vmatpush1.msra.mxu0 0.0
    %1544 = vmatprep.subr.mxu0 0.0
    %1545 = vmatpush1.msra.mxu0 0.0
    %1546 = vmatprep.subr.mxu0 0.0
    %1547 = vmatpush1.msra.mxu0 0.0
    %1548 = vmatprep.subr.mxu0 0.0
    %1549 = vmatpush1.msra.mxu0 0.0
    %1550 = vmatprep.subr.mxu0 0.0
    %1551 = vmatpush1.msra.mxu0 0.0
    %1552 = vmatprep.subr.mxu0 0.0
    %1553 = vmatpush1.msra.mxu0 0.0
    %1554 = vmatprep.subr.mxu0 0.0
    %1555 = vmatpush1.msra.mxu0 0.0
    %1556 = vmatprep.subr.mxu0 0.0
    %1557 = vmatpush1.msra.mxu0 0.0
    %1558 = vmatprep.subr.mxu0 0.0
    %1559 = vmatpush1.msra.mxu0 0.0
    %1560 = vmatprep.subr.mxu0 0.0
    %1561 = vmatpush1.msra.mxu0 0.0
    %1562 = vmatprep.subr.mxu0 0.0
    %1563 = vmatpush1.msra.mxu0 0.0
    %1564 = vmatprep.subr.mxu0 0.0
    %1565 = vmatpush1.msra.mxu0 0.0
    %1566 = vmatprep.subr.mxu0 0.0
    %1567 = vmatpush1.msra.mxu0 0.0
    %1568 = vmatprep.subr.mxu0 0.0
    %1569 = vmatpush1.msra.mxu0 0.0
    %1570 = vmatprep.subr.mxu0 0.0
    %1571 = vmatpush1.msra.mxu0 0.0
    %1572 = vmatprep.subr.mxu0 0.0
    %1573 = vmatpush1.msra.mxu0 0.0
    %1574 = vmatprep.subr.mxu0 0.0
    %1575 = vmatpush1.msra.mxu0 0.0
    %1576 = vmatprep.subr.mxu0 0.0
    %1577 = vmatpush1.msra.mxu0 0.0
    %1578 = vmatprep.subr.mxu0 0.0
    %1579 = vmatpush1.msra.mxu0 0.0
    %1580 = vmatprep.subr.mxu0 0.0
    %1581 = vmatpush1.msra.mxu0 0.0
    %1582 = vmatprep.subr.mxu0 0.0
    %1583 = vmatpush1.msra.mxu0 0.0
    %1584 = vmatprep.subr.mxu0 0.0
    %1585 = vmatpush1.msra.mxu0 0.0
    %1586 = vmatprep.subr.mxu0 0.0
    %1587 = vmatpush1.msra.mxu0 0.0
    %1588 = vmatprep.subr.mxu0 0.0
    %1589 = vmatpush1.msra.mxu0 0.0
    %1590 = vmatprep.subr.mxu0 0.0
    %1591 = vmatpush1.msra.mxu0 0.0
    %1592 = vmatprep.subr.mxu0 0.0
    %1593 = vmatpush1.msra.mxu0 0.0
    %1594 = vmatprep.subr.mxu0 0.0
    %1595 = vmatpush1.msra.mxu0 0.0
    %1596 = vmatprep.subr.mxu0 0.0
    %1597 = vmatpush1.msra.mxu0 0.0
    %1598 = vmatprep.subr.mxu0 0.0
    %1599 = vmatpush1.msra.mxu0 0.0
    %1600 = vmatprep.subr.mxu0 0.0
    %1601 = vmatpush1.msra.mxu0 0.0
    %1602 = vmatprep.mubr.f32.mxu0 0.0
    %1603 = vmatmul.mubr.f32.gmra.mrb[0].mxu0 %v1536
    %v1604 = vpop.f32.mrb[0].mxu0
    %v1605 = vadd.f32 0.0, %v1604
    %v1606 = vpop.f32.mrb[0].mxu0
    %1607 = vdwg.mxu0
    %v1616 = vrot.slane %v1167, 7
    %v1617 = vsel %vm908, %v1616, %v1094
    %v1618 = vrot.slane %v1240, 6
    %v1619 = vsel %vm911, %v1618, %v1617
    %v1620 = vrot.slane %v1313, 5
    %v1621 = vsel %vm914, %v1620, %v1619
    %v1622 = vrot.slane %v1386, 4
    %v1623 = vsel %vm917, %v1622, %v1621
    %v1624 = vrot.slane %v1459, 3
    %v1625 = vsel %vm920, %v1624, %v1623
    %v1626 = vrot.slane %v1532, 2
    %v1627 = vsel %vm923, %v1626, %v1625
    %v1628 = vrot.slane %v1605, 1
    %v1629 = vsel %vm926, %v1628, %v1627
    %1631 = vst.msk [vmem:[#allocation10] sm:$0xff] %vm97, %v1629
    %v1632 = vrot.slane %v1017, 7
    %v1633 = vsel %vm908, %v1632, %v1016
    %v1634 = vrot.slane %v1018, 6
    %v1635 = vsel %vm911, %v1634, %v1633
    %v1636 = vrot.slane %v1019, 5
    %v1637 = vsel %vm914, %v1636, %v1635
    %v1638 = vrot.slane %v1020, 4
    %v1639 = vsel %vm917, %v1638, %v1637
    %v1640 = vrot.slane %v1021, 3
    %v1641 = vsel %vm920, %v1640, %v1639
    %v1642 = vrot.slane %v1022, 2
    %v1643 = vsel %vm923, %v1642, %v1641
    %v1644 = vrot.slane %v1023, 1
    %v1645 = vsel %vm926, %v1644, %v1643
    %1647 = vst.msk [vmem:[#allocation11] sm:$0xff] %vm929, %v1645
    // Predicated region
    $region38: #{tpu_custom_call.1} parent=1 // pred_check
      _
    $region39: #{tpu_custom_call.1} parent=1 // pred_check_branch
      %1649 = sbr.rel (0) target = $region41
    $region40: #{tpu_custom_call.1} parent=1 // pred_region
      %s1651 = ssub.s32 128, 128
      %1652 = vsyncadd [#allocation4], %s1651
      %s1654 = sshll.u32 [#allocation10], 4
      %s1655 = int_to_ptr.vmem [resolvable:$true] %s1654
      %1657 = dma.vmem_to_hbm [thread:$0]  %s1655, 128, %s5, [#allocation4]
    $region41: #{tpu_custom_call.1} parent=1 // pred_fallthru
      _
    // Predicated region
    $region42: #{tpu_custom_call.1} parent=1 // pred_check
      _
    $region43: #{tpu_custom_call.1} parent=1 // pred_check_branch
      %1659 = sbr.rel (0) target = $region45
    $region44: #{tpu_custom_call.1} parent=1 // pred_region
      %s1661 = ssub.s32 128, 128
      %1662 = vsyncadd [#allocation12], %s1661
      %s1664 = sshll.u32 [#allocation11], 4
      %s1665 = int_to_ptr.vmem [resolvable:$true] %s1664
      %1667 = dma.vmem_to_hbm [thread:$0]  %s1665, 128, %s6, [#allocation12]
    $region45: #{tpu_custom_call.1} parent=1 // pred_fallthru
      _
    // Predicated region
    $region46: #{tpu_custom_call.1} parent=1 // pred_check
      _
    $region47: #{tpu_custom_call.1} parent=1 // pred_check_branch
      %1669 = sbr.rel (0) target = $region49
    $region48: #{tpu_custom_call.1} parent=1 // pred_region
      %1670 = dma.done [#allocation4], 128
    $region49: #{tpu_custom_call.1} parent=1 // pred_fallthru
      _
    // Predicated region
    $region50: #{tpu_custom_call.1} parent=1 // pred_check
      _
    $region51: #{tpu_custom_call.1} parent=1 // pred_check_branch
      %1672 = sbr.rel (0) target = $region53
    $region52: #{tpu_custom_call.1} parent=1 // pred_region
      %1673 = dma.done [#allocation12], 128
    $region53: #{tpu_custom_call.1} parent=1 // pred_fallthru
      _
    %1674 = vsyncpa [#allocation3], 1
    %1675 = vsyncpa [#allocation6], 1
    %1676 = vsyncpa [#allocation9], 1
    %1677 = vsyncpa [#allocation4], 1
    %1678 = vsyncpa [#allocation12], 1

</llo_original>
